<compile_context>
chip_gen: v7x
topology: tpu7x:2x2x1
jax: 0.10.0
libtpu: 0.0.40
codegen_flags: <defaults>
</compile_context>

<pallas_src>
import jax
import jax.numpy as jnp
from jax.experimental import pallas as pl
from jax.experimental.pallas import tpu as pltpu

IN_DIM = 28 * 28          # 784
H1, H2, OUT = 128, 64, 10

# Lane-padded dims used inside the kernel.
IN_PAD = 896              # 7 * 128  (784 -> 896)
HP = 128                  # all hidden widths and the output padded to 128


def _round_up(n, m):
    return ((n + m - 1) // m) * m


def _mlp_kernel(x_ref,
                w1_ref, b1_ref,
                w2_ref, b2_ref,
                w3_ref, b3_ref,
                w4_ref, b4_ref,
                w5_ref, b5_ref,
                out_ref):
    # Fused 5-layer MLP: bf16 MXU matmuls with f32 accumulation, f32 bias/ReLU on VPU.
    x = x_ref[...]                                                        # bf16 (tile, 896)

    h = jnp.dot(x, w1_ref[...], preferred_element_type=jnp.float32) + b1_ref[...]
    h = jnp.maximum(h, 0.0).astype(jnp.bfloat16)

    h = jnp.dot(h, w2_ref[...], preferred_element_type=jnp.float32) + b2_ref[...]
    h = jnp.maximum(h, 0.0).astype(jnp.bfloat16)

    h = jnp.dot(h, w3_ref[...], preferred_element_type=jnp.float32) + b3_ref[...]
    h = jnp.maximum(h, 0.0).astype(jnp.bfloat16)

    h = jnp.dot(h, w4_ref[...], preferred_element_type=jnp.float32) + b4_ref[...]
    h = jnp.maximum(h, 0.0).astype(jnp.bfloat16)

    logits = jnp.dot(h, w5_ref[...], preferred_element_type=jnp.float32) + b5_ref[...]
    out_ref[...] = logits.astype(out_ref.dtype)                           # (tile, 128) f32


def _pad_params(params):
    """Zero-pad weights/biases to lane-dense shapes; weights cast to bf16, biases f32."""
    def padw(w, rin, cin):
        return jnp.pad(w, ((0, rin - w.shape[0]), (0, cin - w.shape[1]))).astype(jnp.bfloat16)

    def padb(b, cin):
        return jnp.pad(b, ((0, 0), (0, cin - b.shape[1]))).astype(jnp.float32)

    return (
        padw(params["w1"], IN_PAD, HP), padb(params["b1"], HP),
        padw(params["w2"], HP, HP),     padb(params["b2"], HP),
        padw(params["w3"], HP, HP),     padb(params["b3"], HP),
        padw(params["w4"], HP, HP),     padb(params["b4"], HP),
        padw(params["w5"], HP, HP),     padb(params["b5"], HP),
    )


def resnet_mlp_forward(x, params, *, batch_tile=512):
    """x: (B, 784) float32. params: dict of (in,out) weights and (1,out) biases.

    Returns (B, 10) float32 logits.
    """
    B = x.shape[0]

    # Pick a batch tile: at most `batch_tile`, at least 8, multiple of 8, and the
    # (possibly padded) batch is rounded up to a multiple of the tile.
    tile = _round_up(max(8, min(batch_tile, _round_up(B, 8))), 8)
    Bp = _round_up(B, tile)

    # Pad input: batch B -> Bp, features 784 -> 896; cast to bf16 for the MXU.
    xp = jnp.pad(x, ((0, Bp - B), (0, IN_PAD - IN_DIM))).astype(jnp.bfloat16)

    (w1, b1, w2, b2, w3, b3, w4, b4, w5, b5) = _pad_params(params)

    # Weights/biases are small -> fully resident (full-array block, constant index_map).
    def full_spec(arr):
        return pl.BlockSpec(arr.shape, lambda i: (0, 0))

    grid = (Bp // tile,)

    # Advisory cost estimate (padded dims; bf16 activations/weights, f32 output).
    flops = 2 * Bp * (IN_PAD * HP + 4 * HP * HP)
    bytes_accessed = (Bp * (IN_PAD * 2 + HP * 4)
                      + (IN_PAD * HP + 4 * HP * HP) * 2
                      + 5 * HP * 4)
    cost = pl.CostEstimate(flops=flops, transcendentals=0, bytes_accessed=bytes_accessed)

    out_padded = pl.pallas_call(
        _mlp_kernel,
        out_shape=jax.ShapeDtypeStruct((Bp, HP), jnp.float32),
        grid_spec=pltpu.PrefetchScalarGridSpec(
            num_scalar_prefetch=0,
            grid=grid,
            in_specs=[
                pl.BlockSpec((tile, IN_PAD), lambda i: (i, 0)),  # x (batch-tiled)
                full_spec(w1), full_spec(b1),
                full_spec(w2), full_spec(b2),
                full_spec(w3), full_spec(b3),
                full_spec(w4), full_spec(b4),
                full_spec(w5), full_spec(b5),
            ],
            out_specs=pl.BlockSpec((tile, HP), lambda i: (i, 0)),
        ),
        compiler_params=pltpu.CompilerParams(
            dimension_semantics=("parallel",),   # batch grid shards across TCs on v7x
        ),
        cost_estimate=cost,
    )(xp, w1, b1, w2, b2, w3, b3, w4, b4, w5, b5)

    # Strip batch padding and the lane padding of the logits.
    return out_padded[:B, :OUT]


def init_params(key):
    """Deterministic init mimicking PyTorch nn.Linear default U(-1/sqrt(fan_in), 1/sqrt(fan_in)).
    Weights stored as (in, out) = transpose of PyTorch's (out, in)."""
    dims = [(IN_DIM, H1), (H1, H2), (H2, H2), (H2, H2), (H2, OUT)]
    params = {}
    for idx, (fan_in, fan_out) in enumerate(dims, start=1):
        key, kw, kb = jax.random.split(key, 3)
        bound = 1.0 / jnp.sqrt(jnp.float32(fan_in))
        params[f"w{idx}"] = jax.random.uniform(
            kw, (fan_in, fan_out), jnp.float32, -bound, bound)
        params[f"b{idx}"] = jax.random.uniform(
            kb, (1, fan_out), jnp.float32, -bound, bound)
    return params


def reference_forward_bf16(x, params):
    """Pure-JAX reference matching the kernel's bf16-operand / f32-accumulate math."""
    h = x
    for idx in range(1, 6):
        w = params[f"w{idx}"].astype(jnp.bfloat16)
        h = jnp.dot(h.astype(jnp.bfloat16), w,
                    preferred_element_type=jnp.float32) + params[f"b{idx}"]
        if idx < 5:
            h = jnp.maximum(h, 0.0)
    return h


def reference_forward_f32(x, params):
    h = x
    for idx in range(1, 6):
        h = h @ params[f"w{idx}"] + params[f"b{idx}"]
        if idx < 5:
            h = jnp.maximum(h, 0.0)
    return h


if __name__ == "__main__":
    key = jax.random.PRNGKey(0)
    key, kx = jax.random.split(key)

    B = 64  # small test batch; MNIST flattened input dim is fixed at 784 by the module
    x = jax.random.normal(kx, (B, IN_DIM), jnp.float32)

    params = init_params(key)

    logits = resnet_mlp_forward(x, params, batch_tile=512)
    logits = jax.block_until_ready(logits)

    assert logits.shape == (B, OUT)

    # Tight check against a bf16-operand reference (same quantization as the kernel).
    ref_bf16 = reference_forward_bf16(x, params)
    assert jnp.allclose(logits, ref_bf16, atol=2e-2, rtol=2e-2), "mismatch vs bf16 reference"

    # Looser sanity check against the full-f32 reference.
    ref_f32 = reference_forward_f32(x, params)
    assert jnp.allclose(logits, ref_f32, atol=5e-2, rtol=5e-2), "mismatch vs f32 reference"

    print("KERNEL_OK")
</pallas_src>

<mosaic_0001>
module attributes {stable_mosaic.version = 11 : i64} {
  func.func @_mlp_kernel(%arg0: i32, %arg1: memref<64x896xbf16, #tpu.memory_space<vmem>>, %arg2: memref<896x128xbf16, #tpu.memory_space<vmem>>, %arg3: memref<1x128xf32, #tpu.memory_space<vmem>>, %arg4: memref<128x128xbf16, #tpu.memory_space<vmem>>, %arg5: memref<1x128xf32, #tpu.memory_space<vmem>>, %arg6: memref<128x128xbf16, #tpu.memory_space<vmem>>, %arg7: memref<1x128xf32, #tpu.memory_space<vmem>>, %arg8: memref<128x128xbf16, #tpu.memory_space<vmem>>, %arg9: memref<1x128xf32, #tpu.memory_space<vmem>>, %arg10: memref<128x128xbf16, #tpu.memory_space<vmem>>, %arg11: memref<1x128xf32, #tpu.memory_space<vmem>>, %arg12: memref<64x128xf32, #tpu.memory_space<vmem>>) attributes {dimension_semantics = [#tpu.dimension_semantics<parallel>], iteration_bounds = array<i64: 1>, scalar_prefetch = 0 : i64, scratch_operands = 0 : i64, tpu.core_type = #tpu.core_type<tc>, window_params = [{transform_indices = @transform_0, window_bounds = array<i64: 64, 896>}, {pipeline_mode = #tpu.pipeline_mode<synchronous>, transform_indices = @transform_1, window_bounds = array<i64: 896, 128>}, {pipeline_mode = #tpu.pipeline_mode<synchronous>, transform_indices = @transform_2, window_bounds = array<i64: 1, 128>}, {pipeline_mode = #tpu.pipeline_mode<synchronous>, transform_indices = @transform_3, window_bounds = array<i64: 128, 128>}, {pipeline_mode = #tpu.pipeline_mode<synchronous>, transform_indices = @transform_4, window_bounds = array<i64: 1, 128>}, {pipeline_mode = #tpu.pipeline_mode<synchronous>, transform_indices = @transform_5, window_bounds = array<i64: 128, 128>}, {pipeline_mode = #tpu.pipeline_mode<synchronous>, transform_indices = @transform_6, window_bounds = array<i64: 1, 128>}, {pipeline_mode = #tpu.pipeline_mode<synchronous>, transform_indices = @transform_7, window_bounds = array<i64: 128, 128>}, {pipeline_mode = #tpu.pipeline_mode<synchronous>, transform_indices = @transform_8, window_bounds = array<i64: 1, 128>}, {pipeline_mode = #tpu.pipeline_mode<synchronous>, transform_indices = @transform_9, window_bounds = array<i64: 128, 128>}, {pipeline_mode = #tpu.pipeline_mode<synchronous>, transform_indices = @transform_10, window_bounds = array<i64: 1, 128>}, {transform_indices = @transform_11, window_bounds = array<i64: 64, 128>}]} {
    %c0 = arith.constant 0 : index
    %c0_0 = arith.constant 0 : index
    %0 = vector.load %arg1[%c0, %c0_0] : memref<64x896xbf16, #tpu.memory_space<vmem>>, vector<64x896xbf16>
    %c0_1 = arith.constant 0 : index
    %c0_2 = arith.constant 0 : index
    %1 = vector.load %arg2[%c0_1, %c0_2] : memref<896x128xbf16, #tpu.memory_space<vmem>>, vector<896x128xbf16>
    %cst = arith.constant dense<0.000000e+00> : vector<64x128xf32>
    %2 = tpu.matmul %0, %1, %cst {dimension_numbers = #tpu.dot_dimension_numbers<[1], [0], [0], [1], [0, 0, 1, 1], [], []>} : vector<64x896xbf16>, vector<896x128xbf16>, vector<64x128xf32> -> vector<64x128xf32>
    %c0_3 = arith.constant 0 : index
    %c0_4 = arith.constant 0 : index
    %3 = vector.load %arg3[%c0_3, %c0_4] : memref<1x128xf32, #tpu.memory_space<vmem>>, vector<1x128xf32>
    %4 = vector.broadcast %3 : vector<1x128xf32> to vector<64x128xf32>
    %5 = arith.addf %2, %4 : vector<64x128xf32>
    %cst_5 = arith.constant 0.000000e+00 : f32
    %6 = vector.broadcast %cst_5 : f32 to vector<64x128xf32>
    %7 = arith.maximumf %5, %6 : vector<64x128xf32>
    %8 = arith.truncf %7 : vector<64x128xf32> to vector<64x128xbf16>
    %c0_6 = arith.constant 0 : index
    %c0_7 = arith.constant 0 : index
    %9 = vector.load %arg4[%c0_6, %c0_7] : memref<128x128xbf16, #tpu.memory_space<vmem>>, vector<128x128xbf16>
    %cst_8 = arith.constant dense<0.000000e+00> : vector<64x128xf32>
    %10 = tpu.matmul %8, %9, %cst_8 {dimension_numbers = #tpu.dot_dimension_numbers<[1], [0], [0], [1], [0, 0, 1, 1], [], []>} : vector<64x128xbf16>, vector<128x128xbf16>, vector<64x128xf32> -> vector<64x128xf32>
    %c0_9 = arith.constant 0 : index
    %c0_10 = arith.constant 0 : index
    %11 = vector.load %arg5[%c0_9, %c0_10] : memref<1x128xf32, #tpu.memory_space<vmem>>, vector<1x128xf32>
    %12 = vector.broadcast %11 : vector<1x128xf32> to vector<64x128xf32>
    %13 = arith.addf %10, %12 : vector<64x128xf32>
    %cst_11 = arith.constant 0.000000e+00 : f32
    %14 = vector.broadcast %cst_11 : f32 to vector<64x128xf32>
    %15 = arith.maximumf %13, %14 : vector<64x128xf32>
    %16 = arith.truncf %15 : vector<64x128xf32> to vector<64x128xbf16>
    %c0_12 = arith.constant 0 : index
    %c0_13 = arith.constant 0 : index
    %17 = vector.load %arg6[%c0_12, %c0_13] : memref<128x128xbf16, #tpu.memory_space<vmem>>, vector<128x128xbf16>
    %cst_14 = arith.constant dense<0.000000e+00> : vector<64x128xf32>
    %18 = tpu.matmul %16, %17, %cst_14 {dimension_numbers = #tpu.dot_dimension_numbers<[1], [0], [0], [1], [0, 0, 1, 1], [], []>} : vector<64x128xbf16>, vector<128x128xbf16>, vector<64x128xf32> -> vector<64x128xf32>
    %c0_15 = arith.constant 0 : index
    %c0_16 = arith.constant 0 : index
    %19 = vector.load %arg7[%c0_15, %c0_16] : memref<1x128xf32, #tpu.memory_space<vmem>>, vector<1x128xf32>
    %20 = vector.broadcast %19 : vector<1x128xf32> to vector<64x128xf32>
    %21 = arith.addf %18, %20 : vector<64x128xf32>
    %cst_17 = arith.constant 0.000000e+00 : f32
    %22 = vector.broadcast %cst_17 : f32 to vector<64x128xf32>
    %23 = arith.maximumf %21, %22 : vector<64x128xf32>
    %24 = arith.truncf %23 : vector<64x128xf32> to vector<64x128xbf16>
    %c0_18 = arith.constant 0 : index
    %c0_19 = arith.constant 0 : index
    %25 = vector.load %arg8[%c0_18, %c0_19] : memref<128x128xbf16, #tpu.memory_space<vmem>>, vector<128x128xbf16>
    %cst_20 = arith.constant dense<0.000000e+00> : vector<64x128xf32>
    %26 = tpu.matmul %24, %25, %cst_20 {dimension_numbers = #tpu.dot_dimension_numbers<[1], [0], [0], [1], [0, 0, 1, 1], [], []>} : vector<64x128xbf16>, vector<128x128xbf16>, vector<64x128xf32> -> vector<64x128xf32>
    %c0_21 = arith.constant 0 : index
    %c0_22 = arith.constant 0 : index
    %27 = vector.load %arg9[%c0_21, %c0_22] : memref<1x128xf32, #tpu.memory_space<vmem>>, vector<1x128xf32>
    %28 = vector.broadcast %27 : vector<1x128xf32> to vector<64x128xf32>
    %29 = arith.addf %26, %28 : vector<64x128xf32>
    %cst_23 = arith.constant 0.000000e+00 : f32
    %30 = vector.broadcast %cst_23 : f32 to vector<64x128xf32>
    %31 = arith.maximumf %29, %30 : vector<64x128xf32>
    %32 = arith.truncf %31 : vector<64x128xf32> to vector<64x128xbf16>
    %c0_24 = arith.constant 0 : index
    %c0_25 = arith.constant 0 : index
    %33 = vector.load %arg10[%c0_24, %c0_25] : memref<128x128xbf16, #tpu.memory_space<vmem>>, vector<128x128xbf16>
    %cst_26 = arith.constant dense<0.000000e+00> : vector<64x128xf32>
    %34 = tpu.matmul %32, %33, %cst_26 {dimension_numbers = #tpu.dot_dimension_numbers<[1], [0], [0], [1], [0, 0, 1, 1], [], []>} : vector<64x128xbf16>, vector<128x128xbf16>, vector<64x128xf32> -> vector<64x128xf32>
    %c0_27 = arith.constant 0 : index
    %c0_28 = arith.constant 0 : index
    %35 = vector.load %arg11[%c0_27, %c0_28] : memref<1x128xf32, #tpu.memory_space<vmem>>, vector<1x128xf32>
    %36 = vector.broadcast %35 : vector<1x128xf32> to vector<64x128xf32>
    %37 = arith.addf %34, %36 : vector<64x128xf32>
    %c0_29 = arith.constant 0 : index
    %c0_30 = arith.constant 0 : index
    %38 = vector.load %arg12[%c0_29, %c0_30] : memref<64x128xf32, #tpu.memory_space<vmem>>, vector<64x128xf32>
    tpu.vector_store %arg12[%c0_29, %c0_30], %37 {strides = array<i32>} : memref<64x128xf32, #tpu.memory_space<vmem>>, vector<64x128xf32>,
    return
  }
  func.func @transform_0(%arg0: i32) -> (i32, i32) {
    %c0_i32 = arith.constant 0 : i32
    %c0_i32_0 = arith.constant 0 : i32
    return %arg0, %c0_i32 : i32, i32
  }
  func.func @transform_1(%arg0: i32) -> (i32, i32) {
    %c0_i32 = arith.constant 0 : i32
    %c0_i32_0 = arith.constant 0 : i32
    %c0_i32_1 = arith.constant 0 : i32
    return %c0_i32, %c0_i32_0 : i32, i32
  }
  func.func @transform_2(%arg0: i32) -> (i32, i32) {
    %c0_i32 = arith.constant 0 : i32
    %c0_i32_0 = arith.constant 0 : i32
    %c0_i32_1 = arith.constant 0 : i32
    return %c0_i32, %c0_i32_0 : i32, i32
  }
  func.func @transform_3(%arg0: i32) -> (i32, i32) {
    %c0_i32 = arith.constant 0 : i32
    %c0_i32_0 = arith.constant 0 : i32
    %c0_i32_1 = arith.constant 0 : i32
    return %c0_i32, %c0_i32_0 : i32, i32
  }
  func.func @transform_4(%arg0: i32) -> (i32, i32) {
    %c0_i32 = arith.constant 0 : i32
    %c0_i32_0 = arith.constant 0 : i32
    %c0_i32_1 = arith.constant 0 : i32
    return %c0_i32, %c0_i32_0 : i32, i32
  }
  func.func @transform_5(%arg0: i32) -> (i32, i32) {
    %c0_i32 = arith.constant 0 : i32
    %c0_i32_0 = arith.constant 0 : i32
    %c0_i32_1 = arith.constant 0 : i32
    return %c0_i32, %c0_i32_0 : i32, i32
  }
  func.func @transform_6(%arg0: i32) -> (i32, i32) {
    %c0_i32 = arith.constant 0 : i32
    %c0_i32_0 = arith.constant 0 : i32
    %c0_i32_1 = arith.constant 0 : i32
    return %c0_i32, %c0_i32_0 : i32, i32
  }
  func.func @transform_7(%arg0: i32) -> (i32, i32) {
    %c0_i32 = arith.constant 0 : i32
    %c0_i32_0 = arith.constant 0 : i32
    %c0_i32_1 = arith.constant 0 : i32
    return %c0_i32, %c0_i32_0 : i32, i32
  }
  func.func @transform_8(%arg0: i32) -> (i32, i32) {
    %c0_i32 = arith.constant 0 : i32
    %c0_i32_0 = arith.constant 0 : i32
    %c0_i32_1 = arith.constant 0 : i32
    return %c0_i32, %c0_i32_0 : i32, i32
  }
  func.func @transform_9(%arg0: i32) -> (i32, i32) {
    %c0_i32 = arith.constant 0 : i32
    %c0_i32_0 = arith.constant 0 : i32
    %c0_i32_1 = arith.constant 0 : i32
    return %c0_i32, %c0_i32_0 : i32, i32
  }
  func.func @transform_10(%arg0: i32) -> (i32, i32) {
    %c0_i32 = arith.constant 0 : i32
    %c0_i32_0 = arith.constant 0 : i32
    %c0_i32_1 = arith.constant 0 : i32
    return %c0_i32, %c0_i32_0 : i32, i32
  }
  func.func @transform_11(%arg0: i32) -> (i32, i32) {
    %c0_i32 = arith.constant 0 : i32
    %c0_i32_0 = arith.constant 0 : i32
    return %arg0, %c0_i32 : i32, i32
  }
}

</mosaic_0001>

<llo_original>
// kernel: tpu_custom_call.1
$region0: #{tpu_custom_call.1}
  #allocation0 [shape = 'u32[]', space=smem, size = 0x4, offset = 0x4, fixed_abs, tag = 'smem constant byte address 0x4 - core index']
  #allocation1 [shape = 'u32[144,128]{1,0:T(1,128)}', space=vmem, size = 0x12000, scoped, tag = 'internal scratch']
  %s0 = inlined_call_operand.hbm [shape: bf16[64,896], index: 0, kind: input, shape index: {}]
  %s1 = inlined_call_operand.hbm [shape: bf16[896,128], index: 1, kind: input, shape index: {}]
  %s2 = inlined_call_operand.vmem [shape: f32[1,128], index: 2, kind: input, shape index: {}]
  %s3 = inlined_call_operand.hbm [shape: bf16[128,128], index: 3, kind: input, shape index: {}]
  %s4 = inlined_call_operand.vmem [shape: f32[1,128], index: 4, kind: input, shape index: {}]
  %s5 = inlined_call_operand.hbm [shape: bf16[128,128], index: 5, kind: input, shape index: {}]
  %s6 = inlined_call_operand.vmem [shape: f32[1,128], index: 6, kind: input, shape index: {}]
  %s7 = inlined_call_operand.hbm [shape: bf16[128,128], index: 7, kind: input, shape index: {}]
  %s8 = inlined_call_operand.vmem [shape: f32[1,128], index: 8, kind: input, shape index: {}]
  %s9 = inlined_call_operand.hbm [shape: bf16[128,128], index: 9, kind: input, shape index: {}]
  %s10 = inlined_call_operand.vmem [shape: f32[1,128], index: 10, kind: input, shape index: {}]
  %s11 = inlined_call_operand.hbm [shape: f32[64,128], index: 11, kind: output, shape index: {}]
  %s12 = sld [smem:[#allocation0]]
  $region78: #{tpu_custom_call.1} parent=0
    _
  %s14 = ssub.s32 1, %s12
  %s15 = scalar_select 0, %s14, %s12
  $region1: #{tpu_custom_call.1} parent=0
    #allocation2 [shape = 'u8[114688]{0}', space=vmem, size = 0x1c000, scoped, tag = 'input window, operand 0, single buffered']
    #allocation3 [shape = 's32[1]{0}', space=sflag, size = 0x4, scoped, tag = 'scoped memory for tpu_custom_call.1']
    #allocation4 [shape = 's32[1]{0}', space=sflag, size = 0x4, scoped, tag = 'scoped memory for tpu_custom_call.1']
    #allocation5 [shape = 'u8[229376]{0}', space=vmem, size = 0x38000, scoped, tag = 'input window, operand 1, single buffered']
    #allocation6 [shape = 's32[1]{0}', space=sflag, size = 0x4, scoped, tag = 'scoped memory for tpu_custom_call.1']
    #allocation7 [shape = 'u8[32768]{0}', space=vmem, size = 0x8000, scoped, tag = 'input window, operand 3, single buffered']
    #allocation8 [shape = 'u8[32768]{0}', space=vmem, size = 0x8000, scoped, tag = 'input window, operand 5, single buffered']
    #allocation9 [shape = 's32[1]{0}', space=sflag, size = 0x4, scoped, tag = 'scoped memory for tpu_custom_call.1']
    #allocation10 [shape = 'u8[32768]{0}', space=vmem, size = 0x8000, scoped, tag = 'input window, operand 7, single buffered']
    #allocation11 [shape = 'u8[32768]{0}', space=vmem, size = 0x8000, scoped, tag = 'input window, operand 9, single buffered']
    #allocation12 [shape = 's32[1]{0}', space=sflag, size = 0x4, scoped, tag = 'scoped memory for tpu_custom_call.1']
    #allocation13 [shape = 'u8[32768]{0}', space=vmem, size = 0x8000, scoped, tag = 'output window, operand 0, single buffered']
    %16 = vsyncpa [#allocation3], 0
    %17 = vsyncpa [#allocation6], 0
    %18 = vsyncpa [#allocation9], 0
    %19 = vsyncpa [#allocation12], 0
    %20 = vsyncpa [#allocation4], 0
    // Predicated region
    $region2: #{tpu_custom_call.1} parent=1 // pred_check
      _
    $region3: #{tpu_custom_call.1} parent=1 // pred_check_branch
      %22 = sbr.rel (0) target = $region5
    $region4: #{tpu_custom_call.1} parent=1 // pred_region
      %s24 = ssub.s32 3584, 3584
      %25 = vsyncadd [#allocation3], %s24
      %s26 = sshll.u32 [#allocation2], 4
      %s27 = int_to_ptr.vmem [resolvable:$true] %s26
      %32 = dma.hbm_to_vmem [thread:$0]  %s0, 3584, %s27, [#allocation3], 448, 448, 28
    $region5: #{tpu_custom_call.1} parent=1 // pred_fallthru
      _
    // Predicated region
    $region6: #{tpu_custom_call.1} parent=1 // pred_check
      _
    $region7: #{tpu_custom_call.1} parent=1 // pred_check_branch
      %34 = sbr.rel (0) target = $region9
    $region8: #{tpu_custom_call.1} parent=1 // pred_region
      %s36 = ssub.s32 7168, 7168
      %37 = vsyncadd [#allocation6], %s36
      %s38 = sshll.u32 [#allocation5], 4
      %s39 = int_to_ptr.vmem [resolvable:$true] %s38
      %44 = dma.hbm_to_vmem [thread:$0]  %s1, 7168, %s39, [#allocation6], 64, 64, 4
    $region9: #{tpu_custom_call.1} parent=1 // pred_fallthru
      _
    // Predicated region
    $region10: #{tpu_custom_call.1} parent=1 // pred_check
      _
    $region11: #{tpu_custom_call.1} parent=1 // pred_check_branch
      %46 = sbr.rel (0) target = $region13
    $region12: #{tpu_custom_call.1} parent=1 // pred_region
      _
    $region13: #{tpu_custom_call.1} parent=1 // pred_fallthru
      _
    // Predicated region
    $region14: #{tpu_custom_call.1} parent=1 // pred_check
      _
    $region15: #{tpu_custom_call.1} parent=1 // pred_check_branch
      %48 = sbr.rel (0) target = $region17
    $region16: #{tpu_custom_call.1} parent=1 // pred_region
      %s50 = ssub.s32 1024, 1024
      %51 = vsyncadd [#allocation6], %s50
      %s52 = sshll.u32 [#allocation7], 4
      %s53 = int_to_ptr.vmem [resolvable:$true] %s52
      %58 = dma.hbm_to_vmem [thread:$0]  %s3, 1024, %s53, [#allocation6], 64, 64, 4
    $region17: #{tpu_custom_call.1} parent=1 // pred_fallthru
      _
    // Predicated region
    $region18: #{tpu_custom_call.1} parent=1 // pred_check
      _
    $region19: #{tpu_custom_call.1} parent=1 // pred_check_branch
      %60 = sbr.rel (0) target = $region21
    $region20: #{tpu_custom_call.1} parent=1 // pred_region
      _
    $region21: #{tpu_custom_call.1} parent=1 // pred_fallthru
      _
    // Predicated region
    $region22: #{tpu_custom_call.1} parent=1 // pred_check
      _
    $region23: #{tpu_custom_call.1} parent=1 // pred_check_branch
      %62 = sbr.rel (0) target = $region25
    $region24: #{tpu_custom_call.1} parent=1 // pred_region
      %s64 = ssub.s32 1024, 1024
      %65 = vsyncadd [#allocation9], %s64
      %s66 = sshll.u32 [#allocation8], 4
      %s67 = int_to_ptr.vmem [resolvable:$true] %s66
      %72 = dma.hbm_to_vmem [thread:$0]  %s5, 1024, %s67, [#allocation9], 64, 64, 4
    $region25: #{tpu_custom_call.1} parent=1 // pred_fallthru
      _
    // Predicated region
    $region26: #{tpu_custom_call.1} parent=1 // pred_check
      _
    $region27: #{tpu_custom_call.1} parent=1 // pred_check_branch
      %74 = sbr.rel (0) target = $region29
    $region28: #{tpu_custom_call.1} parent=1 // pred_region
      _
    $region29: #{tpu_custom_call.1} parent=1 // pred_fallthru
      _
    // Predicated region
    $region30: #{tpu_custom_call.1} parent=1 // pred_check
      _
    $region31: #{tpu_custom_call.1} parent=1 // pred_check_branch
      %76 = sbr.rel (0) target = $region33
    $region32: #{tpu_custom_call.1} parent=1 // pred_region
      %s78 = ssub.s32 1024, 1024
      %79 = vsyncadd [#allocation9], %s78
      %s80 = sshll.u32 [#allocation10], 4
      %s81 = int_to_ptr.vmem [resolvable:$true] %s80
      %86 = dma.hbm_to_vmem [thread:$0]  %s7, 1024, %s81, [#allocation9], 64, 64, 4
    $region33: #{tpu_custom_call.1} parent=1 // pred_fallthru
      _
    // Predicated region
    $region34: #{tpu_custom_call.1} parent=1 // pred_check
      _
    $region35: #{tpu_custom_call.1} parent=1 // pred_check_branch
      %88 = sbr.rel (0) target = $region37
    $region36: #{tpu_custom_call.1} parent=1 // pred_region
      _
    $region37: #{tpu_custom_call.1} parent=1 // pred_fallthru
      _
    // Predicated region
    $region38: #{tpu_custom_call.1} parent=1 // pred_check
      _
    $region39: #{tpu_custom_call.1} parent=1 // pred_check_branch
      %90 = sbr.rel (0) target = $region41
    $region40: #{tpu_custom_call.1} parent=1 // pred_region
      %s92 = ssub.s32 1024, 1024
      %93 = vsyncadd [#allocation12], %s92
      %s94 = sshll.u32 [#allocation11], 4
      %s95 = int_to_ptr.vmem [resolvable:$true] %s94
      %100 = dma.hbm_to_vmem [thread:$0]  %s9, 1024, %s95, [#allocation12], 64, 64, 4
    $region41: #{tpu_custom_call.1} parent=1 // pred_fallthru
      _
    // Predicated region
    $region42: #{tpu_custom_call.1} parent=1 // pred_check
      _
    $region43: #{tpu_custom_call.1} parent=1 // pred_check_branch
      %102 = sbr.rel (0) target = $region45
    $region44: #{tpu_custom_call.1} parent=1 // pred_region
      _
    $region45: #{tpu_custom_call.1} parent=1 // pred_fallthru
      _
    // Predicated region
    $region46: #{tpu_custom_call.1} parent=1 // pred_check
      _
    $region47: #{tpu_custom_call.1} parent=1 // pred_check_branch
      %104 = sbr.rel (0) target = $region49
    $region48: #{tpu_custom_call.1} parent=1 // pred_region
      %105 = dma.done [#allocation3], 3584
    $region49: #{tpu_custom_call.1} parent=1 // pred_fallthru
      _
    // Predicated region
    $region50: #{tpu_custom_call.1} parent=1 // pred_check
      _
    $region51: #{tpu_custom_call.1} parent=1 // pred_check_branch
      %107 = sbr.rel (0) target = $region53
    $region52: #{tpu_custom_call.1} parent=1 // pred_region
      %108 = dma.done [#allocation6], 7168
    $region53: #{tpu_custom_call.1} parent=1 // pred_fallthru
      _
    // Predicated region
    $region54: #{tpu_custom_call.1} parent=1 // pred_check
      _
    $region55: #{tpu_custom_call.1} parent=1 // pred_check_branch
      %110 = sbr.rel (0) target = $region57
    $region56: #{tpu_custom_call.1} parent=1 // pred_region
      %111 = dma.done [#allocation6], 1024
    $region57: #{tpu_custom_call.1} parent=1 // pred_fallthru
      _
    // Predicated region
    $region58: #{tpu_custom_call.1} parent=1 // pred_check
      _
    $region59: #{tpu_custom_call.1} parent=1 // pred_check_branch
      %113 = sbr.rel (0) target = $region61
    $region60: #{tpu_custom_call.1} parent=1 // pred_region
      %114 = dma.done [#allocation9], 1024
    $region61: #{tpu_custom_call.1} parent=1 // pred_fallthru
      _
    // Predicated region
    $region62: #{tpu_custom_call.1} parent=1 // pred_check
      _
    $region63: #{tpu_custom_call.1} parent=1 // pred_check_branch
      %116 = sbr.rel (0) target = $region65
    $region64: #{tpu_custom_call.1} parent=1 // pred_region
      %117 = dma.done [#allocation9], 1024
    $region65: #{tpu_custom_call.1} parent=1 // pred_fallthru
      _
    // Predicated region
    $region66: #{tpu_custom_call.1} parent=1 // pred_check
      _
    $region67: #{tpu_custom_call.1} parent=1 // pred_check_branch
      %119 = sbr.rel (0) target = $region69
    $region68: #{tpu_custom_call.1} parent=1 // pred_region
      %120 = dma.done [#allocation12], 1024
    $region69: #{tpu_custom_call.1} parent=1 // pred_fallthru
      _
    %v122 = vld [vmem:[#allocation2] sm:$0xff]
    %v123 = vld [vmem:[#allocation2 + $0x8] sm:$0xff]
    %v124 = vld [vmem:[#allocation2 + $0x10] sm:$0xff]
    %v125 = vld [vmem:[#allocation2 + $0x18] sm:$0xf]
    %v126 = vld [vmem:[#allocation2 + $0x1c] sm:$0xff]
    %v127 = vld [vmem:[#allocation2 + $0x24] sm:$0xff]
    %v128 = vld [vmem:[#allocation2 + $0x2c] sm:$0xff]
    %v129 = vld [vmem:[#allocation2 + $0x34] sm:$0xf]
    %v130 = vld [vmem:[#allocation2 + $0x38] sm:$0xff]
    %v131 = vld [vmem:[#allocation2 + $0x40] sm:$0xff]
    %v132 = vld [vmem:[#allocation2 + $0x48] sm:$0xff]
    %v133 = vld [vmem:[#allocation2 + $0x50] sm:$0xf]
    %v134 = vld [vmem:[#allocation2 + $0x54] sm:$0xff]
    %v135 = vld [vmem:[#allocation2 + $0x5c] sm:$0xff]
    %v136 = vld [vmem:[#allocation2 + $0x64] sm:$0xff]
    %v137 = vld [vmem:[#allocation2 + $0x6c] sm:$0xf]
    %v138 = vld [vmem:[#allocation2 + $0x70] sm:$0xff]
    %v139 = vld [vmem:[#allocation2 + $0x78] sm:$0xff]
    %v140 = vld [vmem:[#allocation2 + $0x80] sm:$0xff]
    %v141 = vld [vmem:[#allocation2 + $0x88] sm:$0xf]
    %v142 = vld [vmem:[#allocation2 + $0x8c] sm:$0xff]
    %v143 = vld [vmem:[#allocation2 + $0x94] sm:$0xff]
    %v144 = vld [vmem:[#allocation2 + $0x9c] sm:$0xff]
    %v145 = vld [vmem:[#allocation2 + $0xa4] sm:$0xf]
    %v146 = vld [vmem:[#allocation2 + $0xa8] sm:$0xff]
    %v147 = vld [vmem:[#allocation2 + $0xb0] sm:$0xff]
    %v148 = vld [vmem:[#allocation2 + $0xb8] sm:$0xff]
    %v149 = vld [vmem:[#allocation2 + $0xc0] sm:$0xf]
    %v150 = vld [vmem:[#allocation2 + $0xc4] sm:$0xff]
    %v151 = vld [vmem:[#allocation2 + $0xcc] sm:$0xff]
    %v152 = vld [vmem:[#allocation2 + $0xd4] sm:$0xff]
    %v153 = vld [vmem:[#allocation2 + $0xdc] sm:$0xf]
    %v154 = vld [vmem:[#allocation5] sm:$0xf]
    %v155 = vld [vmem:[#allocation5 + $0x4] sm:$0xf]
    %v156 = vld [vmem:[#allocation5 + $0x8] sm:$0xf]
    %v157 = vld [vmem:[#allocation5 + $0xc] sm:$0xf]
    %v158 = vld [vmem:[#allocation5 + $0x10] sm:$0xf]
    %v159 = vld [vmem:[#allocation5 + $0x14] sm:$0xf]
    %v160 = vld [vmem:[#allocation5 + $0x18] sm:$0xf]
    %v161 = vld [vmem:[#allocation5 + $0x1c] sm:$0xf]
    %v162 = vld [vmem:[#allocation5 + $0x20] sm:$0xf]
    %v163 = vld [vmem:[#allocation5 + $0x24] sm:$0xf]
    %v164 = vld [vmem:[#allocation5 + $0x28] sm:$0xf]
    %v165 = vld [vmem:[#allocation5 + $0x2c] sm:$0xf]
    %v166 = vld [vmem:[#allocation5 + $0x30] sm:$0xf]
    %v167 = vld [vmem:[#allocation5 + $0x34] sm:$0xf]
    %v168 = vld [vmem:[#allocation5 + $0x38] sm:$0xf]
    %v169 = vld [vmem:[#allocation5 + $0x3c] sm:$0xf]
    %v170 = vld [vmem:[#allocation5 + $0x40] sm:$0xf]
    %v171 = vld [vmem:[#allocation5 + $0x44] sm:$0xf]
    %v172 = vld [vmem:[#allocation5 + $0x48] sm:$0xf]
    %v173 = vld [vmem:[#allocation5 + $0x4c] sm:$0xf]
    %v174 = vld [vmem:[#allocation5 + $0x50] sm:$0xf]
    %v175 = vld [vmem:[#allocation5 + $0x54] sm:$0xf]
    %v176 = vld [vmem:[#allocation5 + $0x58] sm:$0xf]
    %v177 = vld [vmem:[#allocation5 + $0x5c] sm:$0xf]
    %v178 = vld [vmem:[#allocation5 + $0x60] sm:$0xf]
    %v179 = vld [vmem:[#allocation5 + $0x64] sm:$0xf]
    %v180 = vld [vmem:[#allocation5 + $0x68] sm:$0xf]
    %v181 = vld [vmem:[#allocation5 + $0x6c] sm:$0xf]
    %v182 = vld [vmem:[#allocation5 + $0x70] sm:$0xf]
    %v183 = vld [vmem:[#allocation5 + $0x74] sm:$0xf]
    %v184 = vld [vmem:[#allocation5 + $0x78] sm:$0xf]
    %v185 = vld [vmem:[#allocation5 + $0x7c] sm:$0xf]
    %v186 = vld [vmem:[#allocation5 + $0x80] sm:$0xf]
    %v187 = vld [vmem:[#allocation5 + $0x84] sm:$0xf]
    %v188 = vld [vmem:[#allocation5 + $0x88] sm:$0xf]
    %v189 = vld [vmem:[#allocation5 + $0x8c] sm:$0xf]
    %v190 = vld [vmem:[#allocation5 + $0x90] sm:$0xf]
    %v191 = vld [vmem:[#allocation5 + $0x94] sm:$0xf]
    %v192 = vld [vmem:[#allocation5 + $0x98] sm:$0xf]
    %v193 = vld [vmem:[#allocation5 + $0x9c] sm:$0xf]
    %v194 = vld [vmem:[#allocation5 + $0xa0] sm:$0xf]
    %v195 = vld [vmem:[#allocation5 + $0xa4] sm:$0xf]
    %v196 = vld [vmem:[#allocation5 + $0xa8] sm:$0xf]
    %v197 = vld [vmem:[#allocation5 + $0xac] sm:$0xf]
    %v198 = vld [vmem:[#allocation5 + $0xb0] sm:$0xf]
    %v199 = vld [vmem:[#allocation5 + $0xb4] sm:$0xf]
    %v200 = vld [vmem:[#allocation5 + $0xb8] sm:$0xf]
    %v201 = vld [vmem:[#allocation5 + $0xbc] sm:$0xf]
    %v202 = vld [vmem:[#allocation5 + $0xc0] sm:$0xf]
    %v203 = vld [vmem:[#allocation5 + $0xc4] sm:$0xf]
    %v204 = vld [vmem:[#allocation5 + $0xc8] sm:$0xf]
    %v205 = vld [vmem:[#allocation5 + $0xcc] sm:$0xf]
    %v206 = vld [vmem:[#allocation5 + $0xd0] sm:$0xf]
    %v207 = vld [vmem:[#allocation5 + $0xd4] sm:$0xf]
    %v208 = vld [vmem:[#allocation5 + $0xd8] sm:$0xf]
    %v209 = vld [vmem:[#allocation5 + $0xdc] sm:$0xf]
    %v210 = vld [vmem:[#allocation5 + $0xe0] sm:$0xf]
    %v211 = vld [vmem:[#allocation5 + $0xe4] sm:$0xf]
    %v212 = vld [vmem:[#allocation5 + $0xe8] sm:$0xf]
    %v213 = vld [vmem:[#allocation5 + $0xec] sm:$0xf]
    %v214 = vld [vmem:[#allocation5 + $0xf0] sm:$0xf]
    %v215 = vld [vmem:[#allocation5 + $0xf4] sm:$0xf]
    %v216 = vld [vmem:[#allocation5 + $0xf8] sm:$0xf]
    %v217 = vld [vmem:[#allocation5 + $0xfc] sm:$0xf]
    %v218 = vld [vmem:[#allocation5 + $0x100] sm:$0xf]
    %v219 = vld [vmem:[#allocation5 + $0x104] sm:$0xf]
    %v220 = vld [vmem:[#allocation5 + $0x108] sm:$0xf]
    %v221 = vld [vmem:[#allocation5 + $0x10c] sm:$0xf]
    %v222 = vld [vmem:[#allocation5 + $0x110] sm:$0xf]
    %v223 = vld [vmem:[#allocation5 + $0x114] sm:$0xf]
    %v224 = vld [vmem:[#allocation5 + $0x118] sm:$0xf]
    %v225 = vld [vmem:[#allocation5 + $0x11c] sm:$0xf]
    %v226 = vld [vmem:[#allocation5 + $0x120] sm:$0xf]
    %v227 = vld [vmem:[#allocation5 + $0x124] sm:$0xf]
    %v228 = vld [vmem:[#allocation5 + $0x128] sm:$0xf]
    %v229 = vld [vmem:[#allocation5 + $0x12c] sm:$0xf]
    %v230 = vld [vmem:[#allocation5 + $0x130] sm:$0xf]
    %v231 = vld [vmem:[#allocation5 + $0x134] sm:$0xf]
    %v232 = vld [vmem:[#allocation5 + $0x138] sm:$0xf]
    %v233 = vld [vmem:[#allocation5 + $0x13c] sm:$0xf]
    %v234 = vld [vmem:[#allocation5 + $0x140] sm:$0xf]
    %v235 = vld [vmem:[#allocation5 + $0x144] sm:$0xf]
    %v236 = vld [vmem:[#allocation5 + $0x148] sm:$0xf]
    %v237 = vld [vmem:[#allocation5 + $0x14c] sm:$0xf]
    %v238 = vld [vmem:[#allocation5 + $0x150] sm:$0xf]
    %v239 = vld [vmem:[#allocation5 + $0x154] sm:$0xf]
    %v240 = vld [vmem:[#allocation5 + $0x158] sm:$0xf]
    %v241 = vld [vmem:[#allocation5 + $0x15c] sm:$0xf]
    %v242 = vld [vmem:[#allocation5 + $0x160] sm:$0xf]
    %v243 = vld [vmem:[#allocation5 + $0x164] sm:$0xf]
    %v244 = vld [vmem:[#allocation5 + $0x168] sm:$0xf]
    %v245 = vld [vmem:[#allocation5 + $0x16c] sm:$0xf]
    %v246 = vld [vmem:[#allocation5 + $0x170] sm:$0xf]
    %v247 = vld [vmem:[#allocation5 + $0x174] sm:$0xf]
    %v248 = vld [vmem:[#allocation5 + $0x178] sm:$0xf]
    %v249 = vld [vmem:[#allocation5 + $0x17c] sm:$0xf]
    %v250 = vld [vmem:[#allocation5 + $0x180] sm:$0xf]
    %v251 = vld [vmem:[#allocation5 + $0x184] sm:$0xf]
    %v252 = vld [vmem:[#allocation5 + $0x188] sm:$0xf]
    %v253 = vld [vmem:[#allocation5 + $0x18c] sm:$0xf]
    %v254 = vld [vmem:[#allocation5 + $0x190] sm:$0xf]
    %v255 = vld [vmem:[#allocation5 + $0x194] sm:$0xf]
    %v256 = vld [vmem:[#allocation5 + $0x198] sm:$0xf]
    %v257 = vld [vmem:[#allocation5 + $0x19c] sm:$0xf]
    %v258 = vld [vmem:[#allocation5 + $0x1a0] sm:$0xf]
    %v259 = vld [vmem:[#allocation5 + $0x1a4] sm:$0xf]
    %v260 = vld [vmem:[#allocation5 + $0x1a8] sm:$0xf]
    %v261 = vld [vmem:[#allocation5 + $0x1ac] sm:$0xf]
    %v262 = vld [vmem:[#allocation5 + $0x1b0] sm:$0xf]
    %v263 = vld [vmem:[#allocation5 + $0x1b4] sm:$0xf]
    %v264 = vld [vmem:[#allocation5 + $0x1b8] sm:$0xf]
    %v265 = vld [vmem:[#allocation5 + $0x1bc] sm:$0xf]
    %v266 = vld [vmem:[%s2] sm:$0x1]
    %v268 = vlaneseq
    %v269 = vshrl.u32 %v268, 7
    %v270 = vsub.s32 0, %v269
    %v271 = vrot.slane %v266, %v270
    %v305 = vunpack.c.l.b16 %v122
    %v306 = vunpack.c.h.b16 %v122
    %v307 = vunpack.c.l.b16 %v123
    %v308 = vunpack.c.h.b16 %v123
    %v309 = vunpack.c.l.b16 %v124
    %v310 = vunpack.c.h.b16 %v124
    %v311 = vunpack.c.l.b16 %v125
    %v312 = vunpack.c.l.b16 %v126
    %v313 = vunpack.c.h.b16 %v126
    %v314 = vunpack.c.l.b16 %v127
    %v315 = vunpack.c.h.b16 %v127
    %v316 = vunpack.c.l.b16 %v128
    %v317 = vunpack.c.h.b16 %v128
    %v318 = vunpack.c.l.b16 %v129
    %v319 = vunpack.c.l.b16 %v130
    %v320 = vunpack.c.h.b16 %v130
    %v321 = vunpack.c.l.b16 %v131
    %v322 = vunpack.c.h.b16 %v131
    %v323 = vunpack.c.l.b16 %v132
    %v324 = vunpack.c.h.b16 %v132
    %v325 = vunpack.c.l.b16 %v133
    %v326 = vunpack.c.l.b16 %v134
    %v327 = vunpack.c.h.b16 %v134
    %v328 = vunpack.c.l.b16 %v135
    %v329 = vunpack.c.h.b16 %v135
    %v330 = vunpack.c.l.b16 %v136
    %v331 = vunpack.c.h.b16 %v136
    %v332 = vunpack.c.l.b16 %v137
    %v333 = vunpack.c.l.b16 %v138
    %v334 = vunpack.c.h.b16 %v138
    %v335 = vunpack.c.l.b16 %v139
    %v336 = vunpack.c.h.b16 %v139
    %v337 = vunpack.c.l.b16 %v140
    %v338 = vunpack.c.h.b16 %v140
    %v339 = vunpack.c.l.b16 %v141
    %v340 = vunpack.c.l.b16 %v142
    %v341 = vunpack.c.h.b16 %v142
    %v342 = vunpack.c.l.b16 %v143
    %v343 = vunpack.c.h.b16 %v143
    %v344 = vunpack.c.l.b16 %v144
    %v345 = vunpack.c.h.b16 %v144
    %v346 = vunpack.c.l.b16 %v145
    %v347 = vunpack.c.l.b16 %v146
    %v348 = vunpack.c.h.b16 %v146
    %v349 = vunpack.c.l.b16 %v147
    %v350 = vunpack.c.h.b16 %v147
    %v351 = vunpack.c.l.b16 %v148
    %v352 = vunpack.c.h.b16 %v148
    %v353 = vunpack.c.l.b16 %v149
    %v354 = vunpack.c.l.b16 %v150
    %v355 = vunpack.c.h.b16 %v150
    %v356 = vunpack.c.l.b16 %v151
    %v357 = vunpack.c.h.b16 %v151
    %v358 = vunpack.c.l.b16 %v152
    %v359 = vunpack.c.h.b16 %v152
    %v360 = vunpack.c.l.b16 %v153
    %v361 = vpack.c.b16 %v312, %v305
    %v362 = vpack.c.b16 %v313, %v306
    %v363 = vpack.c.b16 %v314, %v307
    %v364 = vpack.c.b16 %v315, %v308
    %v365 = vpack.c.b16 %v316, %v309
    %v366 = vpack.c.b16 %v317, %v310
    %v367 = vpack.c.b16 %v318, %v311
    %v368 = vpack.c.b16 %v326, %v319
    %v369 = vpack.c.b16 %v327, %v320
    %v370 = vpack.c.b16 %v328, %v321
    %v371 = vpack.c.b16 %v329, %v322
    %v372 = vpack.c.b16 %v330, %v323
    %v373 = vpack.c.b16 %v331, %v324
    %v374 = vpack.c.b16 %v332, %v325
    %v375 = vpack.c.b16 %v340, %v333
    %v376 = vpack.c.b16 %v341, %v334
    %v377 = vpack.c.b16 %v342, %v335
    %v378 = vpack.c.b16 %v343, %v336
    %v379 = vpack.c.b16 %v344, %v337
    %v380 = vpack.c.b16 %v345, %v338
    %v381 = vpack.c.b16 %v346, %v339
    %v382 = vpack.c.b16 %v354, %v347
    %v383 = vpack.c.b16 %v355, %v348
    %v384 = vpack.c.b16 %v356, %v349
    %v385 = vpack.c.b16 %v357, %v350
    %v386 = vpack.c.b16 %v358, %v351
    %v387 = vpack.c.b16 %v359, %v352
    %v388 = vpack.c.b16 %v360, %v353
    %v529 = vunpack.c.l.b16 %v154
    %v530 = vunpack.c.l.b16 %v155
    %v531 = vunpack.c.l.b16 %v156
    %v532 = vunpack.c.l.b16 %v157
    %v533 = vunpack.c.l.b16 %v158
    %v534 = vunpack.c.l.b16 %v159
    %v535 = vunpack.c.l.b16 %v160
    %v536 = vunpack.c.l.b16 %v161
    %v537 = vunpack.c.l.b16 %v162
    %v538 = vunpack.c.l.b16 %v163
    %v539 = vunpack.c.l.b16 %v164
    %v540 = vunpack.c.l.b16 %v165
    %v541 = vunpack.c.l.b16 %v166
    %v542 = vunpack.c.l.b16 %v167
    %v543 = vunpack.c.l.b16 %v168
    %v544 = vunpack.c.l.b16 %v169
    %v545 = vunpack.c.l.b16 %v170
    %v546 = vunpack.c.l.b16 %v171
    %v547 = vunpack.c.l.b16 %v172
    %v548 = vunpack.c.l.b16 %v173
    %v549 = vunpack.c.l.b16 %v174
    %v550 = vunpack.c.l.b16 %v175
    %v551 = vunpack.c.l.b16 %v176
    %v552 = vunpack.c.l.b16 %v177
    %v553 = vunpack.c.l.b16 %v178
    %v554 = vunpack.c.l.b16 %v179
    %v555 = vunpack.c.l.b16 %v180
    %v556 = vunpack.c.l.b16 %v181
    %v557 = vunpack.c.l.b16 %v182
    %v558 = vunpack.c.l.b16 %v183
    %v559 = vunpack.c.l.b16 %v184
    %v560 = vunpack.c.l.b16 %v185
    %v561 = vunpack.c.l.b16 %v186
    %v562 = vunpack.c.l.b16 %v187
    %v563 = vunpack.c.l.b16 %v188
    %v564 = vunpack.c.l.b16 %v189
    %v565 = vunpack.c.l.b16 %v190
    %v566 = vunpack.c.l.b16 %v191
    %v567 = vunpack.c.l.b16 %v192
    %v568 = vunpack.c.l.b16 %v193
    %v569 = vunpack.c.l.b16 %v194
    %v570 = vunpack.c.l.b16 %v195
    %v571 = vunpack.c.l.b16 %v196
    %v572 = vunpack.c.l.b16 %v197
    %v573 = vunpack.c.l.b16 %v198
    %v574 = vunpack.c.l.b16 %v199
    %v575 = vunpack.c.l.b16 %v200
    %v576 = vunpack.c.l.b16 %v201
    %v577 = vunpack.c.l.b16 %v202
    %v578 = vunpack.c.l.b16 %v203
    %v579 = vunpack.c.l.b16 %v204
    %v580 = vunpack.c.l.b16 %v205
    %v581 = vunpack.c.l.b16 %v206
    %v582 = vunpack.c.l.b16 %v207
    %v583 = vunpack.c.l.b16 %v208
    %v584 = vunpack.c.l.b16 %v209
    %v585 = vunpack.c.l.b16 %v210
    %v586 = vunpack.c.l.b16 %v211
    %v587 = vunpack.c.l.b16 %v212
    %v588 = vunpack.c.l.b16 %v213
    %v589 = vunpack.c.l.b16 %v214
    %v590 = vunpack.c.l.b16 %v215
    %v591 = vunpack.c.l.b16 %v216
    %v592 = vunpack.c.l.b16 %v217
    %v593 = vunpack.c.l.b16 %v218
    %v594 = vunpack.c.l.b16 %v219
    %v595 = vunpack.c.l.b16 %v220
    %v596 = vunpack.c.l.b16 %v221
    %v597 = vunpack.c.l.b16 %v222
    %v598 = vunpack.c.l.b16 %v223
    %v599 = vunpack.c.l.b16 %v224
    %v600 = vunpack.c.l.b16 %v225
    %v601 = vunpack.c.l.b16 %v226
    %v602 = vunpack.c.l.b16 %v227
    %v603 = vunpack.c.l.b16 %v228
    %v604 = vunpack.c.l.b16 %v229
    %v605 = vunpack.c.l.b16 %v230
    %v606 = vunpack.c.l.b16 %v231
    %v607 = vunpack.c.l.b16 %v232
    %v608 = vunpack.c.l.b16 %v233
    %v609 = vunpack.c.l.b16 %v234
    %v610 = vunpack.c.l.b16 %v235
    %v611 = vunpack.c.l.b16 %v236
    %v612 = vunpack.c.l.b16 %v237
    %v613 = vunpack.c.l.b16 %v238
    %v614 = vunpack.c.l.b16 %v239
    %v615 = vunpack.c.l.b16 %v240
    %v616 = vunpack.c.l.b16 %v241
    %v617 = vunpack.c.l.b16 %v242
    %v618 = vunpack.c.l.b16 %v243
    %v619 = vunpack.c.l.b16 %v244
    %v620 = vunpack.c.l.b16 %v245
    %v621 = vunpack.c.l.b16 %v246
    %v622 = vunpack.c.l.b16 %v247
    %v623 = vunpack.c.l.b16 %v248
    %v624 = vunpack.c.l.b16 %v249
    %v625 = vunpack.c.l.b16 %v250
    %v626 = vunpack.c.l.b16 %v251
    %v627 = vunpack.c.l.b16 %v252
    %v628 = vunpack.c.l.b16 %v253
    %v629 = vunpack.c.l.b16 %v254
    %v630 = vunpack.c.l.b16 %v255
    %v631 = vunpack.c.l.b16 %v256
    %v632 = vunpack.c.l.b16 %v257
    %v633 = vunpack.c.l.b16 %v258
    %v634 = vunpack.c.l.b16 %v259
    %v635 = vunpack.c.l.b16 %v260
    %v636 = vunpack.c.l.b16 %v261
    %v637 = vunpack.c.l.b16 %v262
    %v638 = vunpack.c.l.b16 %v263
    %v639 = vunpack.c.l.b16 %v264
    %v640 = vunpack.c.l.b16 %v265
    %v641 = vpack.c.b16 %v530, %v529
    %v642 = vpack.c.b16 %v532, %v531
    %v643 = vpack.c.b16 %v534, %v533
    %v644 = vpack.c.b16 %v536, %v535
    %v645 = vpack.c.b16 %v538, %v537
    %v646 = vpack.c.b16 %v540, %v539
    %v647 = vpack.c.b16 %v542, %v541
    %v648 = vpack.c.b16 %v544, %v543
    %v649 = vpack.c.b16 %v546, %v545
    %v650 = vpack.c.b16 %v548, %v547
    %v651 = vpack.c.b16 %v550, %v549
    %v652 = vpack.c.b16 %v552, %v551
    %v653 = vpack.c.b16 %v554, %v553
    %v654 = vpack.c.b16 %v556, %v555
    %v655 = vpack.c.b16 %v558, %v557
    %v656 = vpack.c.b16 %v560, %v559
    %v657 = vpack.c.b16 %v562, %v561
    %v658 = vpack.c.b16 %v564, %v563
    %v659 = vpack.c.b16 %v566, %v565
    %v660 = vpack.c.b16 %v568, %v567
    %v661 = vpack.c.b16 %v570, %v569
    %v662 = vpack.c.b16 %v572, %v571
    %v663 = vpack.c.b16 %v574, %v573
    %v664 = vpack.c.b16 %v576, %v575
    %v665 = vpack.c.b16 %v578, %v577
    %v666 = vpack.c.b16 %v580, %v579
    %v667 = vpack.c.b16 %v582, %v581
    %v668 = vpack.c.b16 %v584, %v583
    %v669 = vpack.c.b16 %v586, %v585
    %v670 = vpack.c.b16 %v588, %v587
    %v671 = vpack.c.b16 %v590, %v589
    %v672 = vpack.c.b16 %v592, %v591
    %v673 = vpack.c.b16 %v594, %v593
    %v674 = vpack.c.b16 %v596, %v595
    %v675 = vpack.c.b16 %v598, %v597
    %v676 = vpack.c.b16 %v600, %v599
    %v677 = vpack.c.b16 %v602, %v601
    %v678 = vpack.c.b16 %v604, %v603
    %v679 = vpack.c.b16 %v606, %v605
    %v680 = vpack.c.b16 %v608, %v607
    %v681 = vpack.c.b16 %v610, %v609
    %v682 = vpack.c.b16 %v612, %v611
    %v683 = vpack.c.b16 %v614, %v613
    %v684 = vpack.c.b16 %v616, %v615
    %v685 = vpack.c.b16 %v618, %v617
    %v686 = vpack.c.b16 %v620, %v619
    %v687 = vpack.c.b16 %v622, %v621
    %v688 = vpack.c.b16 %v624, %v623
    %v689 = vpack.c.b16 %v626, %v625
    %v690 = vpack.c.b16 %v628, %v627
    %v691 = vpack.c.b16 %v630, %v629
    %v692 = vpack.c.b16 %v632, %v631
    %v693 = vpack.c.b16 %v634, %v633
    %v694 = vpack.c.b16 %v636, %v635
    %v695 = vpack.c.b16 %v638, %v637
    %v696 = vpack.c.b16 %v640, %v639
    %753 = vmatprep.subr.bf16.mxu0 0
    %754 = vmatpush1.bf16.msra.mxu0 %v641
    %755 = vmatprep.subr.bf16.mxu0 0
    %756 = vmatpush1.bf16.msra.mxu0 %v642
    %757 = vmatprep.subr.bf16.mxu0 0
    %758 = vmatpush1.bf16.msra.mxu0 %v643
    %759 = vmatprep.subr.bf16.mxu0 0
    %760 = vmatpush1.bf16.msra.mxu0 %v644
    %761 = vmatprep.subr.bf16.mxu0 0
    %762 = vmatpush1.bf16.msra.mxu0 %v645
    %763 = vmatprep.subr.bf16.mxu0 0
    %764 = vmatpush1.bf16.msra.mxu0 %v646
    %765 = vmatprep.subr.bf16.mxu0 0
    %766 = vmatpush1.bf16.msra.mxu0 %v647
    %767 = vmatprep.subr.bf16.mxu0 0
    %768 = vmatpush1.bf16.msra.mxu0 %v648
    %769 = vmatprep.subr.bf16.mxu0 0
    %770 = vmatpush1.bf16.msra.mxu0 %v649
    %771 = vmatprep.subr.bf16.mxu0 0
    %772 = vmatpush1.bf16.msra.mxu0 %v650
    %773 = vmatprep.subr.bf16.mxu0 0
    %774 = vmatpush1.bf16.msra.mxu0 %v651
    %775 = vmatprep.subr.bf16.mxu0 0
    %776 = vmatpush1.bf16.msra.mxu0 %v652
    %777 = vmatprep.subr.bf16.mxu0 0
    %778 = vmatpush1.bf16.msra.mxu0 %v653
    %779 = vmatprep.subr.bf16.mxu0 0
    %780 = vmatpush1.bf16.msra.mxu0 %v654
    %781 = vmatprep.subr.bf16.mxu0 0
    %782 = vmatpush1.bf16.msra.mxu0 %v655
    %783 = vmatprep.subr.bf16.mxu0 0
    %784 = vmatpush1.bf16.msra.mxu0 %v656
    %785 = vmatprep.mubr.bf16.mxu0 %v362
    %786 = vmatmul.mubr.bf16.gmra.mrb[0].mxu0 %v361
    %v787 = vpop.f32.mrb[0].mxu0
    %v788 = vadd.f32 %v271, %v787
    %v789 = vpop.f32.mrb[0].mxu0
    %v790 = vpop.f32.mrb[0].mxu0
    %v791 = vadd.f32 %v271, %v790
    %v792 = vpop.f32.mrb[0].mxu0
    %793 = vmatprep.mubr.bf16.mxu0 %v369
    %794 = vmatmul.mubr.bf16.gmra.mrb[0].mxu0 %v368
    %v795 = vpop.f32.mrb[0].mxu0
    %v796 = vadd.f32 %v271, %v795
    %v797 = vpop.f32.mrb[0].mxu0
    %v798 = vpop.f32.mrb[0].mxu0
    %v799 = vadd.f32 %v271, %v798
    %v800 = vpop.f32.mrb[0].mxu0
    %801 = vmatprep.mubr.bf16.mxu0 %v376
    %802 = vmatmul.mubr.bf16.gmra.mrb[0].mxu0 %v375
    %v803 = vpop.f32.mrb[0].mxu0
    %v804 = vadd.f32 %v271, %v803
    %v805 = vpop.f32.mrb[0].mxu0
    %v806 = vpop.f32.mrb[0].mxu0
    %v807 = vadd.f32 %v271, %v806
    %v808 = vpop.f32.mrb[0].mxu0
    %809 = vmatprep.mubr.bf16.mxu0 %v383
    %810 = vmatmul.mubr.bf16.gmra.mrb[0].mxu0 %v382
    %v811 = vpop.f32.mrb[0].mxu0
    %v812 = vadd.f32 %v271, %v811
    %v813 = vpop.f32.mrb[0].mxu0
    %v814 = vpop.f32.mrb[0].mxu0
    %v815 = vadd.f32 %v271, %v814
    %v816 = vpop.f32.mrb[0].mxu0
    %817 = vdwg.mxu0
    %818 = vmatprep.subr.bf16.mxu0 0
    %819 = vmatpush1.bf16.msra.mxu0 %v657
    %820 = vmatprep.subr.bf16.mxu0 0
    %821 = vmatpush1.bf16.msra.mxu0 %v658
    %822 = vmatprep.subr.bf16.mxu0 0
    %823 = vmatpush1.bf16.msra.mxu0 %v659
    %824 = vmatprep.subr.bf16.mxu0 0
    %825 = vmatpush1.bf16.msra.mxu0 %v660
    %826 = vmatprep.subr.bf16.mxu0 0
    %827 = vmatpush1.bf16.msra.mxu0 %v661
    %828 = vmatprep.subr.bf16.mxu0 0
    %829 = vmatpush1.bf16.msra.mxu0 %v662
    %830 = vmatprep.subr.bf16.mxu0 0
    %831 = vmatpush1.bf16.msra.mxu0 %v663
    %832 = vmatprep.subr.bf16.mxu0 0
    %833 = vmatpush1.bf16.msra.mxu0 %v664
    %834 = vmatprep.subr.bf16.mxu0 0
    %835 = vmatpush1.bf16.msra.mxu0 %v665
    %836 = vmatprep.subr.bf16.mxu0 0
    %837 = vmatpush1.bf16.msra.mxu0 %v666
    %838 = vmatprep.subr.bf16.mxu0 0
    %839 = vmatpush1.bf16.msra.mxu0 %v667
    %840 = vmatprep.subr.bf16.mxu0 0
    %841 = vmatpush1.bf16.msra.mxu0 %v668
    %842 = vmatprep.subr.bf16.mxu0 0
    %843 = vmatpush1.bf16.msra.mxu0 %v669
    %844 = vmatprep.subr.bf16.mxu0 0
    %845 = vmatpush1.bf16.msra.mxu0 %v670
    %846 = vmatprep.subr.bf16.mxu0 0
    %847 = vmatpush1.bf16.msra.mxu0 %v671
    %848 = vmatprep.subr.bf16.mxu0 0
    %849 = vmatpush1.bf16.msra.mxu0 %v672
    %850 = vmatprep.mubr.bf16.mxu0 %v364
    %851 = vmatmul.mubr.bf16.gmra.mrb[0].mxu0 %v363
    %v852 = vpop.f32.mrb[0].mxu0
    %v853 = vadd.f32 %v788, %v852
    %v854 = vpop.f32.mrb[0].mxu0
    %v855 = vpop.f32.mrb[0].mxu0
    %v856 = vadd.f32 %v791, %v855
    %v857 = vpop.f32.mrb[0].mxu0
    %858 = vmatprep.mubr.bf16.mxu0 %v371
    %859 = vmatmul.mubr.bf16.gmra.mrb[0].mxu0 %v370
    %v860 = vpop.f32.mrb[0].mxu0
    %v861 = vadd.f32 %v796, %v860
    %v862 = vpop.f32.mrb[0].mxu0
    %v863 = vpop.f32.mrb[0].mxu0
    %v864 = vadd.f32 %v799, %v863
    %v865 = vpop.f32.mrb[0].mxu0
    %866 = vmatprep.mubr.bf16.mxu0 %v378
    %867 = vmatmul.mubr.bf16.gmra.mrb[0].mxu0 %v377
    %v868 = vpop.f32.mrb[0].mxu0
    %v869 = vadd.f32 %v804, %v868
    %v870 = vpop.f32.mrb[0].mxu0
    %v871 = vpop.f32.mrb[0].mxu0
    %v872 = vadd.f32 %v807, %v871
    %v873 = vpop.f32.mrb[0].mxu0
    %874 = vmatprep.mubr.bf16.mxu0 %v385
    %875 = vmatmul.mubr.bf16.gmra.mrb[0].mxu0 %v384
    %v876 = vpop.f32.mrb[0].mxu0
    %v877 = vadd.f32 %v812, %v876
    %v878 = vpop.f32.mrb[0].mxu0
    %v879 = vpop.f32.mrb[0].mxu0
    %v880 = vadd.f32 %v815, %v879
    %v881 = vpop.f32.mrb[0].mxu0
    %882 = vdwg.mxu0
    %883 = vmatprep.subr.bf16.mxu0 0
    %884 = vmatpush1.bf16.msra.mxu0 %v673
    %885 = vmatprep.subr.bf16.mxu0 0
    %886 = vmatpush1.bf16.msra.mxu0 %v674
    %887 = vmatprep.subr.bf16.mxu0 0
    %888 = vmatpush1.bf16.msra.mxu0 %v675
    %889 = vmatprep.subr.bf16.mxu0 0
    %890 = vmatpush1.bf16.msra.mxu0 %v676
    %891 = vmatprep.subr.bf16.mxu0 0
    %892 = vmatpush1.bf16.msra.mxu0 %v677
    %893 = vmatprep.subr.bf16.mxu0 0
    %894 = vmatpush1.bf16.msra.mxu0 %v678
    %895 = vmatprep.subr.bf16.mxu0 0
    %896 = vmatpush1.bf16.msra.mxu0 %v679
    %897 = vmatprep.subr.bf16.mxu0 0
    %898 = vmatpush1.bf16.msra.mxu0 %v680
    %899 = vmatprep.subr.bf16.mxu0 0
    %900 = vmatpush1.bf16.msra.mxu0 %v681
    %901 = vmatprep.subr.bf16.mxu0 0
    %902 = vmatpush1.bf16.msra.mxu0 %v682
    %903 = vmatprep.subr.bf16.mxu0 0
    %904 = vmatpush1.bf16.msra.mxu0 %v683
    %905 = vmatprep.subr.bf16.mxu0 0
    %906 = vmatpush1.bf16.msra.mxu0 %v684
    %907 = vmatprep.subr.bf16.mxu0 0
    %908 = vmatpush1.bf16.msra.mxu0 %v685
    %909 = vmatprep.subr.bf16.mxu0 0
    %910 = vmatpush1.bf16.msra.mxu0 %v686
    %911 = vmatprep.subr.bf16.mxu0 0
    %912 = vmatpush1.bf16.msra.mxu0 %v687
    %913 = vmatprep.subr.bf16.mxu0 0
    %914 = vmatpush1.bf16.msra.mxu0 %v688
    %915 = vmatprep.mubr.bf16.mxu0 %v366
    %916 = vmatmul.mubr.bf16.gmra.mrb[0].mxu0 %v365
    %v917 = vpop.f32.mrb[0].mxu0
    %v918 = vadd.f32 %v853, %v917
    %v919 = vpop.f32.mrb[0].mxu0
    %v920 = vpop.f32.mrb[0].mxu0
    %v921 = vadd.f32 %v856, %v920
    %v922 = vpop.f32.mrb[0].mxu0
    %923 = vmatprep.mubr.bf16.mxu0 %v373
    %924 = vmatmul.mubr.bf16.gmra.mrb[0].mxu0 %v372
    %v925 = vpop.f32.mrb[0].mxu0
    %v926 = vadd.f32 %v861, %v925
    %v927 = vpop.f32.mrb[0].mxu0
    %v928 = vpop.f32.mrb[0].mxu0
    %v929 = vadd.f32 %v864, %v928
    %v930 = vpop.f32.mrb[0].mxu0
    %931 = vmatprep.mubr.bf16.mxu0 %v380
    %932 = vmatmul.mubr.bf16.gmra.mrb[0].mxu0 %v379
    %v933 = vpop.f32.mrb[0].mxu0
    %v934 = vadd.f32 %v869, %v933
    %v935 = vpop.f32.mrb[0].mxu0
    %v936 = vpop.f32.mrb[0].mxu0
    %v937 = vadd.f32 %v872, %v936
    %v938 = vpop.f32.mrb[0].mxu0
    %939 = vmatprep.mubr.bf16.mxu0 %v387
    %940 = vmatmul.mubr.bf16.gmra.mrb[0].mxu0 %v386
    %v941 = vpop.f32.mrb[0].mxu0
    %v942 = vadd.f32 %v877, %v941
    %v943 = vpop.f32.mrb[0].mxu0
    %v944 = vpop.f32.mrb[0].mxu0
    %v945 = vadd.f32 %v880, %v944
    %v946 = vpop.f32.mrb[0].mxu0
    %947 = vdwg.mxu0
    %948 = vmatprep.subr.bf16.mxu0 0
    %949 = vmatpush1.bf16.msra.mxu0 %v689
    %950 = vmatprep.subr.bf16.mxu0 0
    %951 = vmatpush1.bf16.msra.mxu0 %v690
    %952 = vmatprep.subr.bf16.mxu0 0
    %953 = vmatpush1.bf16.msra.mxu0 %v691
    %954 = vmatprep.subr.bf16.mxu0 0
    %955 = vmatpush1.bf16.msra.mxu0 %v692
    %956 = vmatprep.subr.bf16.mxu0 0
    %957 = vmatpush1.bf16.msra.mxu0 %v693
    %958 = vmatprep.subr.bf16.mxu0 0
    %959 = vmatpush1.bf16.msra.mxu0 %v694
    %960 = vmatprep.subr.bf16.mxu0 0
    %961 = vmatpush1.bf16.msra.mxu0 %v695
    %962 = vmatprep.subr.bf16.mxu0 0
    %963 = vmatpush1.bf16.msra.mxu0 %v696
    %964 = vmatprep.subr.bf16.mxu0 0
    %965 = vmatpush1.bf16.msra.mxu0 0
    %966 = vmatprep.subr.bf16.mxu0 0
    %967 = vmatpush1.bf16.msra.mxu0 0
    %968 = vmatprep.subr.bf16.mxu0 0
    %969 = vmatpush1.bf16.msra.mxu0 0
    %970 = vmatprep.subr.bf16.mxu0 0
    %971 = vmatpush1.bf16.msra.mxu0 0
    %972 = vmatprep.subr.bf16.mxu0 0
    %973 = vmatpush1.bf16.msra.mxu0 0
    %974 = vmatprep.subr.bf16.mxu0 0
    %975 = vmatpush1.bf16.msra.mxu0 0
    %976 = vmatprep.subr.bf16.mxu0 0
    %977 = vmatpush1.bf16.msra.mxu0 0
    %978 = vmatprep.subr.bf16.mxu0 0
    %979 = vmatpush1.bf16.msra.mxu0 0
    %980 = vmatprep.mubr.bf16.mxu0 0
    %981 = vmatmul.mubr.bf16.gmra.mrb[0].mxu0 %v367
    %v982 = vpop.f32.mrb[0].mxu0
    %v983 = vadd.f32 %v918, %v982
    %v984 = vpop.f32.mrb[0].mxu0
    %v985 = vpop.f32.mrb[0].mxu0
    %v986 = vadd.f32 %v921, %v985
    %v987 = vpop.f32.mrb[0].mxu0
    %988 = vmatprep.mubr.bf16.mxu0 0
    %989 = vmatmul.mubr.bf16.gmra.mrb[0].mxu0 %v374
    %v990 = vpop.f32.mrb[0].mxu0
    %v991 = vadd.f32 %v926, %v990
    %v992 = vpop.f32.mrb[0].mxu0
    %v993 = vpop.f32.mrb[0].mxu0
    %v994 = vadd.f32 %v929, %v993
    %v995 = vpop.f32.mrb[0].mxu0
    %996 = vmatprep.mubr.bf16.mxu0 0
    %997 = vmatmul.mubr.bf16.gmra.mrb[0].mxu0 %v381
    %v998 = vpop.f32.mrb[0].mxu0
    %v999 = vadd.f32 %v934, %v998
    %v1000 = vpop.f32.mrb[0].mxu0
    %v1001 = vpop.f32.mrb[0].mxu0
    %v1002 = vadd.f32 %v937, %v1001
    %v1003 = vpop.f32.mrb[0].mxu0
    %1004 = vmatprep.mubr.bf16.mxu0 0
    %1005 = vmatmul.mubr.bf16.gmra.mrb[0].mxu0 %v388
    %v1006 = vpop.f32.mrb[0].mxu0
    %v1007 = vadd.f32 %v942, %v1006
    %v1008 = vpop.f32.mrb[0].mxu0
    %v1009 = vpop.f32.mrb[0].mxu0
    %v1010 = vadd.f32 %v945, %v1009
    %v1011 = vpop.f32.mrb[0].mxu0
    %1012 = vdwg.mxu0
    %v1013 = vmax.f32 %v983, 0.0
    %v1014 = vmax.f32 %v986, 0.0
    %v1015 = vmax.f32 %v991, 0.0
    %v1016 = vmax.f32 %v994, 0.0
    %v1017 = vmax.f32 %v999, 0.0
    %v1018 = vmax.f32 %v1002, 0.0
    %v1019 = vmax.f32 %v1007, 0.0
    %v1020 = vmax.f32 %v1010, 0.0
    %v1021 = vpack.c.bf16 %v1014, %v1013
    %v1022 = vpack.c.bf16 %v1016, %v1015
    %v1023 = vpack.c.bf16 %v1018, %v1017
    %v1024 = vpack.c.bf16 %v1020, %v1019
    %v1025 = vld [vmem:[#allocation7] sm:$0xf]
    %v1026 = vld [vmem:[#allocation7 + $0x4] sm:$0xf]
    %v1027 = vld [vmem:[#allocation7 + $0x8] sm:$0xf]
    %v1028 = vld [vmem:[#allocation7 + $0xc] sm:$0xf]
    %v1029 = vld [vmem:[#allocation7 + $0x10] sm:$0xf]
    %v1030 = vld [vmem:[#allocation7 + $0x14] sm:$0xf]
    %v1031 = vld [vmem:[#allocation7 + $0x18] sm:$0xf]
    %v1032 = vld [vmem:[#allocation7 + $0x1c] sm:$0xf]
    %v1033 = vld [vmem:[#allocation7 + $0x20] sm:$0xf]
    %v1034 = vld [vmem:[#allocation7 + $0x24] sm:$0xf]
    %v1035 = vld [vmem:[#allocation7 + $0x28] sm:$0xf]
    %v1036 = vld [vmem:[#allocation7 + $0x2c] sm:$0xf]
    %v1037 = vld [vmem:[#allocation7 + $0x30] sm:$0xf]
    %v1038 = vld [vmem:[#allocation7 + $0x34] sm:$0xf]
    %v1039 = vld [vmem:[#allocation7 + $0x38] sm:$0xf]
    %v1040 = vld [vmem:[#allocation7 + $0x3c] sm:$0xf]
    %v1041 = vld [vmem:[%s4] sm:$0x1]
    %v1043 = vlaneseq
    %v1044 = vshrl.u32 %v1043, 7
    %v1045 = vsub.s32 0, %v1044
    %v1046 = vrot.slane %v1041, %v1045
    %v1064 = vunpack.c.l.b16 %v1025
    %v1065 = vunpack.c.l.b16 %v1026
    %v1066 = vunpack.c.l.b16 %v1027
    %v1067 = vunpack.c.l.b16 %v1028
    %v1068 = vunpack.c.l.b16 %v1029
    %v1069 = vunpack.c.l.b16 %v1030
    %v1070 = vunpack.c.l.b16 %v1031
    %v1071 = vunpack.c.l.b16 %v1032
    %v1072 = vunpack.c.l.b16 %v1033
    %v1073 = vunpack.c.l.b16 %v1034
    %v1074 = vunpack.c.l.b16 %v1035
    %v1075 = vunpack.c.l.b16 %v1036
    %v1076 = vunpack.c.l.b16 %v1037
    %v1077 = vunpack.c.l.b16 %v1038
    %v1078 = vunpack.c.l.b16 %v1039
    %v1079 = vunpack.c.l.b16 %v1040
    %v1080 = vpack.c.b16 %v1065, %v1064
    %v1081 = vpack.c.b16 %v1067, %v1066
    %v1082 = vpack.c.b16 %v1069, %v1068
    %v1083 = vpack.c.b16 %v1071, %v1070
    %v1084 = vpack.c.b16 %v1073, %v1072
    %v1085 = vpack.c.b16 %v1075, %v1074
    %v1086 = vpack.c.b16 %v1077, %v1076
    %v1087 = vpack.c.b16 %v1079, %v1078
    %1096 = vmatprep.subr.bf16.mxu0 0
    %1097 = vmatpush1.bf16.msra.mxu0 %v1080
    %1098 = vmatprep.subr.bf16.mxu0 0
    %1099 = vmatpush1.bf16.msra.mxu0 %v1081
    %1100 = vmatprep.subr.bf16.mxu0 0
    %1101 = vmatpush1.bf16.msra.mxu0 %v1082
    %1102 = vmatprep.subr.bf16.mxu0 0
    %1103 = vmatpush1.bf16.msra.mxu0 %v1083
    %1104 = vmatprep.subr.bf16.mxu0 0
    %1105 = vmatpush1.bf16.msra.mxu0 %v1084
    %1106 = vmatprep.subr.bf16.mxu0 0
    %1107 = vmatpush1.bf16.msra.mxu0 %v1085
    %1108 = vmatprep.subr.bf16.mxu0 0
    %1109 = vmatpush1.bf16.msra.mxu0 %v1086
    %1110 = vmatprep.subr.bf16.mxu0 0
    %1111 = vmatpush1.bf16.msra.mxu0 %v1087
    %1112 = vmatprep.subr.bf16.mxu0 0
    %1113 = vmatpush1.bf16.msra.mxu0 0
    %1114 = vmatprep.subr.bf16.mxu0 0
    %1115 = vmatpush1.bf16.msra.mxu0 0
    %1116 = vmatprep.subr.bf16.mxu0 0
    %1117 = vmatpush1.bf16.msra.mxu0 0
    %1118 = vmatprep.subr.bf16.mxu0 0
    %1119 = vmatpush1.bf16.msra.mxu0 0
    %1120 = vmatprep.subr.bf16.mxu0 0
    %1121 = vmatpush1.bf16.msra.mxu0 0
    %1122 = vmatprep.subr.bf16.mxu0 0
    %1123 = vmatpush1.bf16.msra.mxu0 0
    %1124 = vmatprep.subr.bf16.mxu0 0
    %1125 = vmatpush1.bf16.msra.mxu0 0
    %1126 = vmatprep.subr.bf16.mxu0 0
    %1127 = vmatpush1.bf16.msra.mxu0 0
    %1128 = vmatprep.mubr.bf16.mxu0 0
    %1129 = vmatmul.mubr.bf16.gmra.mrb[0].mxu0 %v1021
    %v1130 = vpop.f32.mrb[0].mxu0
    %v1131 = vadd.f32 %v1046, %v1130
    %v1132 = vpop.f32.mrb[0].mxu0
    %v1133 = vpop.f32.mrb[0].mxu0
    %v1134 = vadd.f32 %v1046, %v1133
    %v1135 = vpop.f32.mrb[0].mxu0
    %1136 = vmatprep.mubr.bf16.mxu0 0
    %1137 = vmatmul.mubr.bf16.gmra.mrb[0].mxu0 %v1022
    %v1138 = vpop.f32.mrb[0].mxu0
    %v1139 = vadd.f32 %v1046, %v1138
    %v1140 = vpop.f32.mrb[0].mxu0
    %v1141 = vpop.f32.mrb[0].mxu0
    %v1142 = vadd.f32 %v1046, %v1141
    %v1143 = vpop.f32.mrb[0].mxu0
    %1144 = vmatprep.mubr.bf16.mxu0 0
    %1145 = vmatmul.mubr.bf16.gmra.mrb[0].mxu0 %v1023
    %v1146 = vpop.f32.mrb[0].mxu0
    %v1147 = vadd.f32 %v1046, %v1146
    %v1148 = vpop.f32.mrb[0].mxu0
    %v1149 = vpop.f32.mrb[0].mxu0
    %v1150 = vadd.f32 %v1046, %v1149
    %v1151 = vpop.f32.mrb[0].mxu0
    %1152 = vmatprep.mubr.bf16.mxu0 0
    %1153 = vmatmul.mubr.bf16.gmra.mrb[0].mxu0 %v1024
    %v1154 = vpop.f32.mrb[0].mxu0
    %v1155 = vadd.f32 %v1046, %v1154
    %v1156 = vpop.f32.mrb[0].mxu0
    %v1157 = vpop.f32.mrb[0].mxu0
    %v1158 = vadd.f32 %v1046, %v1157
    %v1159 = vpop.f32.mrb[0].mxu0
    %1160 = vdwg.mxu0
    %v1161 = vmax.f32 %v1131, 0.0
    %v1162 = vmax.f32 %v1134, 0.0
    %v1163 = vmax.f32 %v1139, 0.0
    %v1164 = vmax.f32 %v1142, 0.0
    %v1165 = vmax.f32 %v1147, 0.0
    %v1166 = vmax.f32 %v1150, 0.0
    %v1167 = vmax.f32 %v1155, 0.0
    %v1168 = vmax.f32 %v1158, 0.0
    %v1169 = vpack.c.bf16 %v1162, %v1161
    %v1170 = vpack.c.bf16 %v1164, %v1163
    %v1171 = vpack.c.bf16 %v1166, %v1165
    %v1172 = vpack.c.bf16 %v1168, %v1167
    %v1173 = vld [vmem:[#allocation8] sm:$0xf]
    %v1174 = vld [vmem:[#allocation8 + $0x4] sm:$0xf]
    %v1175 = vld [vmem:[#allocation8 + $0x8] sm:$0xf]
    %v1176 = vld [vmem:[#allocation8 + $0xc] sm:$0xf]
    %v1177 = vld [vmem:[#allocation8 + $0x10] sm:$0xf]
    %v1178 = vld [vmem:[#allocation8 + $0x14] sm:$0xf]
    %v1179 = vld [vmem:[#allocation8 + $0x18] sm:$0xf]
    %v1180 = vld [vmem:[#allocation8 + $0x1c] sm:$0xf]
    %v1181 = vld [vmem:[#allocation8 + $0x20] sm:$0xf]
    %v1182 = vld [vmem:[#allocation8 + $0x24] sm:$0xf]
    %v1183 = vld [vmem:[#allocation8 + $0x28] sm:$0xf]
    %v1184 = vld [vmem:[#allocation8 + $0x2c] sm:$0xf]
    %v1185 = vld [vmem:[#allocation8 + $0x30] sm:$0xf]
    %v1186 = vld [vmem:[#allocation8 + $0x34] sm:$0xf]
    %v1187 = vld [vmem:[#allocation8 + $0x38] sm:$0xf]
    %v1188 = vld [vmem:[#allocation8 + $0x3c] sm:$0xf]
    %v1189 = vld [vmem:[%s6] sm:$0x1]
    %v1191 = vlaneseq
    %v1192 = vshrl.u32 %v1191, 7
    %v1193 = vsub.s32 0, %v1192
    %v1194 = vrot.slane %v1189, %v1193
    %v1212 = vunpack.c.l.b16 %v1173
    %v1213 = vunpack.c.l.b16 %v1174
    %v1214 = vunpack.c.l.b16 %v1175
    %v1215 = vunpack.c.l.b16 %v1176
    %v1216 = vunpack.c.l.b16 %v1177
    %v1217 = vunpack.c.l.b16 %v1178
    %v1218 = vunpack.c.l.b16 %v1179
    %v1219 = vunpack.c.l.b16 %v1180
    %v1220 = vunpack.c.l.b16 %v1181
    %v1221 = vunpack.c.l.b16 %v1182
    %v1222 = vunpack.c.l.b16 %v1183
    %v1223 = vunpack.c.l.b16 %v1184
    %v1224 = vunpack.c.l.b16 %v1185
    %v1225 = vunpack.c.l.b16 %v1186
    %v1226 = vunpack.c.l.b16 %v1187
    %v1227 = vunpack.c.l.b16 %v1188
    %v1228 = vpack.c.b16 %v1213, %v1212
    %v1229 = vpack.c.b16 %v1215, %v1214
    %v1230 = vpack.c.b16 %v1217, %v1216
    %v1231 = vpack.c.b16 %v1219, %v1218
    %v1232 = vpack.c.b16 %v1221, %v1220
    %v1233 = vpack.c.b16 %v1223, %v1222
    %v1234 = vpack.c.b16 %v1225, %v1224
    %v1235 = vpack.c.b16 %v1227, %v1226
    %1244 = vmatprep.subr.bf16.mxu0 0
    %1245 = vmatpush1.bf16.msra.mxu0 %v1228
    %1246 = vmatprep.subr.bf16.mxu0 0
    %1247 = vmatpush1.bf16.msra.mxu0 %v1229
    %1248 = vmatprep.subr.bf16.mxu0 0
    %1249 = vmatpush1.bf16.msra.mxu0 %v1230
    %1250 = vmatprep.subr.bf16.mxu0 0
    %1251 = vmatpush1.bf16.msra.mxu0 %v1231
    %1252 = vmatprep.subr.bf16.mxu0 0
    %1253 = vmatpush1.bf16.msra.mxu0 %v1232
    %1254 = vmatprep.subr.bf16.mxu0 0
    %1255 = vmatpush1.bf16.msra.mxu0 %v1233
    %1256 = vmatprep.subr.bf16.mxu0 0
    %1257 = vmatpush1.bf16.msra.mxu0 %v1234
    %1258 = vmatprep.subr.bf16.mxu0 0
    %1259 = vmatpush1.bf16.msra.mxu0 %v1235
    %1260 = vmatprep.subr.bf16.mxu0 0
    %1261 = vmatpush1.bf16.msra.mxu0 0
    %1262 = vmatprep.subr.bf16.mxu0 0
    %1263 = vmatpush1.bf16.msra.mxu0 0
    %1264 = vmatprep.subr.bf16.mxu0 0
    %1265 = vmatpush1.bf16.msra.mxu0 0
    %1266 = vmatprep.subr.bf16.mxu0 0
    %1267 = vmatpush1.bf16.msra.mxu0 0
    %1268 = vmatprep.subr.bf16.mxu0 0
    %1269 = vmatpush1.bf16.msra.mxu0 0
    %1270 = vmatprep.subr.bf16.mxu0 0
    %1271 = vmatpush1.bf16.msra.mxu0 0
    %1272 = vmatprep.subr.bf16.mxu0 0
    %1273 = vmatpush1.bf16.msra.mxu0 0
    %1274 = vmatprep.subr.bf16.mxu0 0
    %1275 = vmatpush1.bf16.msra.mxu0 0
    %1276 = vmatprep.mubr.bf16.mxu0 0
    %1277 = vmatmul.mubr.bf16.gmra.mrb[0].mxu0 %v1169
    %v1278 = vpop.f32.mrb[0].mxu0
    %v1279 = vadd.f32 %v1194, %v1278
    %v1280 = vpop.f32.mrb[0].mxu0
    %v1281 = vpop.f32.mrb[0].mxu0
    %v1282 = vadd.f32 %v1194, %v1281
    %v1283 = vpop.f32.mrb[0].mxu0
    %1284 = vmatprep.mubr.bf16.mxu0 0
    %1285 = vmatmul.mubr.bf16.gmra.mrb[0].mxu0 %v1170
    %v1286 = vpop.f32.mrb[0].mxu0
    %v1287 = vadd.f32 %v1194, %v1286
    %v1288 = vpop.f32.mrb[0].mxu0
    %v1289 = vpop.f32.mrb[0].mxu0
    %v1290 = vadd.f32 %v1194, %v1289
    %v1291 = vpop.f32.mrb[0].mxu0
    %1292 = vmatprep.mubr.bf16.mxu0 0
    %1293 = vmatmul.mubr.bf16.gmra.mrb[0].mxu0 %v1171
    %v1294 = vpop.f32.mrb[0].mxu0
    %v1295 = vadd.f32 %v1194, %v1294
    %v1296 = vpop.f32.mrb[0].mxu0
    %v1297 = vpop.f32.mrb[0].mxu0
    %v1298 = vadd.f32 %v1194, %v1297
    %v1299 = vpop.f32.mrb[0].mxu0
    %1300 = vmatprep.mubr.bf16.mxu0 0
    %1301 = vmatmul.mubr.bf16.gmra.mrb[0].mxu0 %v1172
    %v1302 = vpop.f32.mrb[0].mxu0
    %v1303 = vadd.f32 %v1194, %v1302
    %v1304 = vpop.f32.mrb[0].mxu0
    %v1305 = vpop.f32.mrb[0].mxu0
    %v1306 = vadd.f32 %v1194, %v1305
    %v1307 = vpop.f32.mrb[0].mxu0
    %1308 = vdwg.mxu0
    %v1309 = vmax.f32 %v1279, 0.0
    %v1310 = vmax.f32 %v1282, 0.0
    %v1311 = vmax.f32 %v1287, 0.0
    %v1312 = vmax.f32 %v1290, 0.0
    %v1313 = vmax.f32 %v1295, 0.0
    %v1314 = vmax.f32 %v1298, 0.0
    %v1315 = vmax.f32 %v1303, 0.0
    %v1316 = vmax.f32 %v1306, 0.0
    %v1317 = vpack.c.bf16 %v1310, %v1309
    %v1318 = vpack.c.bf16 %v1312, %v1311
    %v1319 = vpack.c.bf16 %v1314, %v1313
    %v1320 = vpack.c.bf16 %v1316, %v1315
    %v1321 = vld [vmem:[#allocation10] sm:$0xf]
    %v1322 = vld [vmem:[#allocation10 + $0x4] sm:$0xf]
    %v1323 = vld [vmem:[#allocation10 + $0x8] sm:$0xf]
    %v1324 = vld [vmem:[#allocation10 + $0xc] sm:$0xf]
    %v1325 = vld [vmem:[#allocation10 + $0x10] sm:$0xf]
    %v1326 = vld [vmem:[#allocation10 + $0x14] sm:$0xf]
    %v1327 = vld [vmem:[#allocation10 + $0x18] sm:$0xf]
    %v1328 = vld [vmem:[#allocation10 + $0x1c] sm:$0xf]
    %v1329 = vld [vmem:[#allocation10 + $0x20] sm:$0xf]
    %v1330 = vld [vmem:[#allocation10 + $0x24] sm:$0xf]
    %v1331 = vld [vmem:[#allocation10 + $0x28] sm:$0xf]
    %v1332 = vld [vmem:[#allocation10 + $0x2c] sm:$0xf]
    %v1333 = vld [vmem:[#allocation10 + $0x30] sm:$0xf]
    %v1334 = vld [vmem:[#allocation10 + $0x34] sm:$0xf]
    %v1335 = vld [vmem:[#allocation10 + $0x38] sm:$0xf]
    %v1336 = vld [vmem:[#allocation10 + $0x3c] sm:$0xf]
    %v1337 = vld [vmem:[%s8] sm:$0x1]
    %v1339 = vlaneseq
    %v1340 = vshrl.u32 %v1339, 7
    %v1341 = vsub.s32 0, %v1340
    %v1342 = vrot.slane %v1337, %v1341
    %v1360 = vunpack.c.l.b16 %v1321
    %v1361 = vunpack.c.l.b16 %v1322
    %v1362 = vunpack.c.l.b16 %v1323
    %v1363 = vunpack.c.l.b16 %v1324
    %v1364 = vunpack.c.l.b16 %v1325
    %v1365 = vunpack.c.l.b16 %v1326
    %v1366 = vunpack.c.l.b16 %v1327
    %v1367 = vunpack.c.l.b16 %v1328
    %v1368 = vunpack.c.l.b16 %v1329
    %v1369 = vunpack.c.l.b16 %v1330
    %v1370 = vunpack.c.l.b16 %v1331
    %v1371 = vunpack.c.l.b16 %v1332
    %v1372 = vunpack.c.l.b16 %v1333
    %v1373 = vunpack.c.l.b16 %v1334
    %v1374 = vunpack.c.l.b16 %v1335
    %v1375 = vunpack.c.l.b16 %v1336
    %v1376 = vpack.c.b16 %v1361, %v1360
    %v1377 = vpack.c.b16 %v1363, %v1362
    %v1378 = vpack.c.b16 %v1365, %v1364
    %v1379 = vpack.c.b16 %v1367, %v1366
    %v1380 = vpack.c.b16 %v1369, %v1368
    %v1381 = vpack.c.b16 %v1371, %v1370
    %v1382 = vpack.c.b16 %v1373, %v1372
    %v1383 = vpack.c.b16 %v1375, %v1374
    %1392 = vmatprep.subr.bf16.mxu0 0
    %1393 = vmatpush1.bf16.msra.mxu0 %v1376
    %1394 = vmatprep.subr.bf16.mxu0 0
    %1395 = vmatpush1.bf16.msra.mxu0 %v1377
    %1396 = vmatprep.subr.bf16.mxu0 0
    %1397 = vmatpush1.bf16.msra.mxu0 %v1378
    %1398 = vmatprep.subr.bf16.mxu0 0
    %1399 = vmatpush1.bf16.msra.mxu0 %v1379
    %1400 = vmatprep.subr.bf16.mxu0 0
    %1401 = vmatpush1.bf16.msra.mxu0 %v1380
    %1402 = vmatprep.subr.bf16.mxu0 0
    %1403 = vmatpush1.bf16.msra.mxu0 %v1381
    %1404 = vmatprep.subr.bf16.mxu0 0
    %1405 = vmatpush1.bf16.msra.mxu0 %v1382
    %1406 = vmatprep.subr.bf16.mxu0 0
    %1407 = vmatpush1.bf16.msra.mxu0 %v1383
    %1408 = vmatprep.subr.bf16.mxu0 0
    %1409 = vmatpush1.bf16.msra.mxu0 0
    %1410 = vmatprep.subr.bf16.mxu0 0
    %1411 = vmatpush1.bf16.msra.mxu0 0
    %1412 = vmatprep.subr.bf16.mxu0 0
    %1413 = vmatpush1.bf16.msra.mxu0 0
    %1414 = vmatprep.subr.bf16.mxu0 0
    %1415 = vmatpush1.bf16.msra.mxu0 0
    %1416 = vmatprep.subr.bf16.mxu0 0
    %1417 = vmatpush1.bf16.msra.mxu0 0
    %1418 = vmatprep.subr.bf16.mxu0 0
    %1419 = vmatpush1.bf16.msra.mxu0 0
    %1420 = vmatprep.subr.bf16.mxu0 0
    %1421 = vmatpush1.bf16.msra.mxu0 0
    %1422 = vmatprep.subr.bf16.mxu0 0
    %1423 = vmatpush1.bf16.msra.mxu0 0
    %1424 = vmatprep.mubr.bf16.mxu0 0
    %1425 = vmatmul.mubr.bf16.gmra.mrb[0].mxu0 %v1317
    %v1426 = vpop.f32.mrb[0].mxu0
    %v1427 = vadd.f32 %v1342, %v1426
    %v1428 = vpop.f32.mrb[0].mxu0
    %v1429 = vpop.f32.mrb[0].mxu0
    %v1430 = vadd.f32 %v1342, %v1429
    %v1431 = vpop.f32.mrb[0].mxu0
    %1432 = vmatprep.mubr.bf16.mxu0 0
    %1433 = vmatmul.mubr.bf16.gmra.mrb[0].mxu0 %v1318
    %v1434 = vpop.f32.mrb[0].mxu0
    %v1435 = vadd.f32 %v1342, %v1434
    %v1436 = vpop.f32.mrb[0].mxu0
    %v1437 = vpop.f32.mrb[0].mxu0
    %v1438 = vadd.f32 %v1342, %v1437
    %v1439 = vpop.f32.mrb[0].mxu0
    %1440 = vmatprep.mubr.bf16.mxu0 0
    %1441 = vmatmul.mubr.bf16.gmra.mrb[0].mxu0 %v1319
    %v1442 = vpop.f32.mrb[0].mxu0
    %v1443 = vadd.f32 %v1342, %v1442
    %v1444 = vpop.f32.mrb[0].mxu0
    %v1445 = vpop.f32.mrb[0].mxu0
    %v1446 = vadd.f32 %v1342, %v1445
    %v1447 = vpop.f32.mrb[0].mxu0
    %1448 = vmatprep.mubr.bf16.mxu0 0
    %1449 = vmatmul.mubr.bf16.gmra.mrb[0].mxu0 %v1320
    %v1450 = vpop.f32.mrb[0].mxu0
    %v1451 = vadd.f32 %v1342, %v1450
    %v1452 = vpop.f32.mrb[0].mxu0
    %v1453 = vpop.f32.mrb[0].mxu0
    %v1454 = vadd.f32 %v1342, %v1453
    %v1455 = vpop.f32.mrb[0].mxu0
    %1456 = vdwg.mxu0
    %v1457 = vmax.f32 %v1427, 0.0
    %v1458 = vmax.f32 %v1430, 0.0
    %v1459 = vmax.f32 %v1435, 0.0
    %v1460 = vmax.f32 %v1438, 0.0
    %v1461 = vmax.f32 %v1443, 0.0
    %v1462 = vmax.f32 %v1446, 0.0
    %v1463 = vmax.f32 %v1451, 0.0
    %v1464 = vmax.f32 %v1454, 0.0
    %v1465 = vpack.c.bf16 %v1458, %v1457
    %v1466 = vpack.c.bf16 %v1460, %v1459
    %v1467 = vpack.c.bf16 %v1462, %v1461
    %v1468 = vpack.c.bf16 %v1464, %v1463
    %v1469 = vld [vmem:[#allocation11] sm:$0xf]
    %v1470 = vld [vmem:[#allocation11 + $0x4] sm:$0xf]
    %v1471 = vld [vmem:[#allocation11 + $0x8] sm:$0xf]
    %v1472 = vld [vmem:[#allocation11 + $0xc] sm:$0xf]
    %v1473 = vld [vmem:[#allocation11 + $0x10] sm:$0xf]
    %v1474 = vld [vmem:[#allocation11 + $0x14] sm:$0xf]
    %v1475 = vld [vmem:[#allocation11 + $0x18] sm:$0xf]
    %v1476 = vld [vmem:[#allocation11 + $0x1c] sm:$0xf]
    %v1477 = vld [vmem:[#allocation11 + $0x20] sm:$0xf]
    %v1478 = vld [vmem:[#allocation11 + $0x24] sm:$0xf]
    %v1479 = vld [vmem:[#allocation11 + $0x28] sm:$0xf]
    %v1480 = vld [vmem:[#allocation11 + $0x2c] sm:$0xf]
    %v1481 = vld [vmem:[#allocation11 + $0x30] sm:$0xf]
    %v1482 = vld [vmem:[#allocation11 + $0x34] sm:$0xf]
    %v1483 = vld [vmem:[#allocation11 + $0x38] sm:$0xf]
    %v1484 = vld [vmem:[#allocation11 + $0x3c] sm:$0xf]
    %v1485 = vld [vmem:[%s10] sm:$0x1]
    %v1487 = vlaneseq
    %v1488 = vshrl.u32 %v1487, 7
    %v1489 = vsub.s32 0, %v1488
    %v1490 = vrot.slane %v1485, %v1489
    %v1508 = vunpack.c.l.b16 %v1469
    %v1509 = vunpack.c.l.b16 %v1470
    %v1510 = vunpack.c.l.b16 %v1471
    %v1511 = vunpack.c.l.b16 %v1472
    %v1512 = vunpack.c.l.b16 %v1473
    %v1513 = vunpack.c.l.b16 %v1474
    %v1514 = vunpack.c.l.b16 %v1475
    %v1515 = vunpack.c.l.b16 %v1476
    %v1516 = vunpack.c.l.b16 %v1477
    %v1517 = vunpack.c.l.b16 %v1478
    %v1518 = vunpack.c.l.b16 %v1479
    %v1519 = vunpack.c.l.b16 %v1480
    %v1520 = vunpack.c.l.b16 %v1481
    %v1521 = vunpack.c.l.b16 %v1482
    %v1522 = vunpack.c.l.b16 %v1483
    %v1523 = vunpack.c.l.b16 %v1484
    %v1524 = vpack.c.b16 %v1509, %v1508
    %v1525 = vpack.c.b16 %v1511, %v1510
    %v1526 = vpack.c.b16 %v1513, %v1512
    %v1527 = vpack.c.b16 %v1515, %v1514
    %v1528 = vpack.c.b16 %v1517, %v1516
    %v1529 = vpack.c.b16 %v1519, %v1518
    %v1530 = vpack.c.b16 %v1521, %v1520
    %v1531 = vpack.c.b16 %v1523, %v1522
    %1540 = vmatprep.subr.bf16.mxu0 0
    %1541 = vmatpush1.bf16.msra.mxu0 %v1524
    %1542 = vmatprep.subr.bf16.mxu0 0
    %1543 = vmatpush1.bf16.msra.mxu0 %v1525
    %1544 = vmatprep.subr.bf16.mxu0 0
    %1545 = vmatpush1.bf16.msra.mxu0 %v1526
    %1546 = vmatprep.subr.bf16.mxu0 0
    %1547 = vmatpush1.bf16.msra.mxu0 %v1527
    %1548 = vmatprep.subr.bf16.mxu0 0
    %1549 = vmatpush1.bf16.msra.mxu0 %v1528
    %1550 = vmatprep.subr.bf16.mxu0 0
    %1551 = vmatpush1.bf16.msra.mxu0 %v1529
    %1552 = vmatprep.subr.bf16.mxu0 0
    %1553 = vmatpush1.bf16.msra.mxu0 %v1530
    %1554 = vmatprep.subr.bf16.mxu0 0
    %1555 = vmatpush1.bf16.msra.mxu0 %v1531
    %1556 = vmatprep.subr.bf16.mxu0 0
    %1557 = vmatpush1.bf16.msra.mxu0 0
    %1558 = vmatprep.subr.bf16.mxu0 0
    %1559 = vmatpush1.bf16.msra.mxu0 0
    %1560 = vmatprep.subr.bf16.mxu0 0
    %1561 = vmatpush1.bf16.msra.mxu0 0
    %1562 = vmatprep.subr.bf16.mxu0 0
    %1563 = vmatpush1.bf16.msra.mxu0 0
    %1564 = vmatprep.subr.bf16.mxu0 0
    %1565 = vmatpush1.bf16.msra.mxu0 0
    %1566 = vmatprep.subr.bf16.mxu0 0
    %1567 = vmatpush1.bf16.msra.mxu0 0
    %1568 = vmatprep.subr.bf16.mxu0 0
    %1569 = vmatpush1.bf16.msra.mxu0 0
    %1570 = vmatprep.subr.bf16.mxu0 0
    %1571 = vmatpush1.bf16.msra.mxu0 0
    %1572 = vmatprep.mubr.bf16.mxu0 0
    %1573 = vmatmul.mubr.bf16.gmra.mrb[0].mxu0 %v1465
    %v1574 = vpop.f32.mrb[0].mxu0
    %v1575 = vadd.f32 %v1490, %v1574
    %v1576 = vpop.f32.mrb[0].mxu0
    %v1577 = vpop.f32.mrb[0].mxu0
    %v1578 = vadd.f32 %v1490, %v1577
    %v1579 = vpop.f32.mrb[0].mxu0
    %1580 = vmatprep.mubr.bf16.mxu0 0
    %1581 = vmatmul.mubr.bf16.gmra.mrb[0].mxu0 %v1466
    %v1582 = vpop.f32.mrb[0].mxu0
    %v1583 = vadd.f32 %v1490, %v1582
    %v1584 = vpop.f32.mrb[0].mxu0
    %v1585 = vpop.f32.mrb[0].mxu0
    %v1586 = vadd.f32 %v1490, %v1585
    %v1587 = vpop.f32.mrb[0].mxu0
    %1588 = vmatprep.mubr.bf16.mxu0 0
    %1589 = vmatmul.mubr.bf16.gmra.mrb[0].mxu0 %v1467
    %v1590 = vpop.f32.mrb[0].mxu0
    %v1591 = vadd.f32 %v1490, %v1590
    %v1592 = vpop.f32.mrb[0].mxu0
    %v1593 = vpop.f32.mrb[0].mxu0
    %v1594 = vadd.f32 %v1490, %v1593
    %v1595 = vpop.f32.mrb[0].mxu0
    %1596 = vmatprep.mubr.bf16.mxu0 0
    %1597 = vmatmul.mubr.bf16.gmra.mrb[0].mxu0 %v1468
    %v1598 = vpop.f32.mrb[0].mxu0
    %v1599 = vadd.f32 %v1490, %v1598
    %v1600 = vpop.f32.mrb[0].mxu0
    %v1601 = vpop.f32.mrb[0].mxu0
    %v1602 = vadd.f32 %v1490, %v1601
    %v1603 = vpop.f32.mrb[0].mxu0
    %1604 = vdwg.mxu0
    %1605 = vst [vmem:[#allocation13] sm:$0xff] %v1575
    %1606 = vst [vmem:[#allocation13 + $0x8] sm:$0xff] %v1578
    %1607 = vst [vmem:[#allocation13 + $0x10] sm:$0xff] %v1583
    %1608 = vst [vmem:[#allocation13 + $0x18] sm:$0xff] %v1586
    %1609 = vst [vmem:[#allocation13 + $0x20] sm:$0xff] %v1591
    %1610 = vst [vmem:[#allocation13 + $0x28] sm:$0xff] %v1594
    %1611 = vst [vmem:[#allocation13 + $0x30] sm:$0xff] %v1599
    %1612 = vst [vmem:[#allocation13 + $0x38] sm:$0xff] %v1602
    // Predicated region
    $region70: #{tpu_custom_call.1} parent=1 // pred_check
      _
    $region71: #{tpu_custom_call.1} parent=1 // pred_check_branch
      %1614 = sbr.rel (0) target = $region73
    $region72: #{tpu_custom_call.1} parent=1 // pred_region
      %s1616 = ssub.s32 1024, 1024
      %1617 = vsyncadd [#allocation4], %s1616
      %s1618 = sshll.u32 [#allocation13], 4
      %s1619 = int_to_ptr.vmem [resolvable:$true] %s1618
      %1624 = dma.vmem_to_hbm [thread:$0]  %s1619, 1024, %s11, [#allocation4], 128, 128, 8
    $region73: #{tpu_custom_call.1} parent=1 // pred_fallthru
      _
    // Predicated region
    $region74: #{tpu_custom_call.1} parent=1 // pred_check
      _
    $region75: #{tpu_custom_call.1} parent=1 // pred_check_branch
      %1626 = sbr.rel (0) target = $region77
    $region76: #{tpu_custom_call.1} parent=1 // pred_region
      %1627 = dma.done [#allocation4], 1024
    $region77: #{tpu_custom_call.1} parent=1 // pred_fallthru
      _
    %1628 = vsyncpa [#allocation3], 1
    %1629 = vsyncpa [#allocation6], 1
    %1630 = vsyncpa [#allocation9], 1
    %1631 = vsyncpa [#allocation12], 1
    %1632 = vsyncpa [#allocation4], 1

</llo_original>
